<compile_context>
chip_gen: v7x
topology: tpu7x:2x2x1
jax: 0.10.0
libtpu: 0.0.40
codegen_flags: <defaults>
</compile_context>

<pallas_src>
import jax
import jax.numpy as jnp
from jax.experimental import pallas as pl
from jax.experimental.pallas import tpu as pltpu

D_IN = 64 * 64        # 4096 flattened input/output features (multiple of 128)
D_H  = 1000           # hidden width
D_Z  = 10             # bottleneck width
D_ZP = 128            # bottleneck padded to one lane tile
TN   = 1024           # output column tile (lane-dense, 8 x 128 lanes)
N_TILES = D_IN // TN  # 4 grid steps


def _folded_ae_kernel(x_ref, a_ref, c_ref, bp_ref, out_ref):
    """One output-column tile of  y = (x @ A) @ C + b'  (f32 accumulation)."""
    # z = x @ A : (b_pad, 128) f32.  Recomputed per tile -- it is tiny (rank-10
    # bottleneck) and keeping it tile-local avoids any cross-iteration scratch,
    # which is what lets the grid axis be "parallel" (megacore-safe).
    z = jnp.dot(x_ref[...], a_ref[...], preferred_element_type=jnp.float32)
    # out tile = z @ C_tile + b'_tile : lane-dense (b_pad, 1024) f32 store.
    out_ref[...] = jnp.dot(z.astype(jnp.bfloat16), c_ref[...],
                           preferred_element_type=jnp.float32) + bp_ref[...]


@jax.jit
def autoencoder1_forward(x_nchw, folded):
    """x_nchw: [B, 1, 64, 64] f32 -> [B, 1, 64, 64] f32 (== PyTorch forward)."""
    B = x_nchw.shape[0]
    b_pad = max(8, ((B + 7) // 8) * 8)                    # sublane-aligned batch
    x = x_nchw.reshape(B, -1).astype(jnp.bfloat16)        # x.view(B, -1)
    x = jnp.pad(x, ((0, b_pad - B), (0, 0)))

    out = pl.pallas_call(
        _folded_ae_kernel,
        out_shape=jax.ShapeDtypeStruct((b_pad, D_IN), jnp.float32),
        grid_spec=pltpu.PrefetchScalarGridSpec(
            num_scalar_prefetch=0,
            grid=(N_TILES,),
            in_specs=[
                pl.BlockSpec((b_pad, D_IN), lambda j: (0, 0)),  # x   (resident)
                pl.BlockSpec((D_IN, D_ZP),  lambda j: (0, 0)),  # A   (resident)
                pl.BlockSpec((D_ZP, TN),    lambda j: (0, j)),  # C   column tile
                pl.BlockSpec((1, TN),       lambda j: (0, j)),  # b'  column tile
            ],
            out_specs=pl.BlockSpec((b_pad, TN), lambda j: (0, j)),
        ),
        compiler_params=pltpu.CompilerParams(
            dimension_semantics=("parallel",),     # v7x: both TCs split tiles
            vmem_limit_bytes=8 * 1024 * 1024,      # working set is ~2.7 MiB
        ),
    )(x, folded["a"], folded["c"], folded["bp"])

    return out[:B].reshape(B, 1, 64, 64)                  # .view(B, 1, 64, 64)


# ---------------------------------------------------------------------------
# Parameters: PyTorch nn.Linear-style init, stored [in, out] so y = x @ W + b.
# ---------------------------------------------------------------------------
def init_params(key):
    def linear(k, fan_in, fan_out):
        kw, kb = jax.random.split(k)
        bound = fan_in ** -0.5
        w = jax.random.uniform(kw, (fan_in, fan_out), jnp.float32, -bound, bound)
        b = jax.random.uniform(kb, (fan_out,), jnp.float32, -bound, bound)
        return w, b

    k1, k2, k3, k4 = jax.random.split(key, 4)
    w1, b1 = linear(k1, D_IN, D_H)   # encoder Linear(4096, 1000)
    w2, b2 = linear(k2, D_H, D_Z)    # encoder Linear(1000, 10)
    w3, b3 = linear(k3, D_Z, D_H)    # decoder Linear(10, 1000)
    w4, b4 = linear(k4, D_H, D_IN)   # decoder Linear(1000, 4096)
    return dict(w1=w1, b1=b1, w2=w2, b2=b2, w3=w3, b3=b3, w4=w4, b4=b4)


def fold_params(p):
    """One-time f32 folding of the purely-linear network; cast to bf16 once.

    Must be re-run whenever the underlying per-layer weights change.  Padded
    rows/cols (10 -> 128) are zero, so the padding is mathematically inert;
    the folded bias b' keeps full f32 precision.
    """
    a = p["w1"] @ p["w2"]                                           # (4096, 10)
    c = p["w3"] @ p["w4"]                                           # (10, 4096)
    bp = ((p["b1"] @ p["w2"] + p["b2"]) @ p["w3"] + p["b3"]) @ p["w4"] + p["b4"]
    a = jnp.pad(a, ((0, 0), (0, D_ZP - D_Z))).astype(jnp.bfloat16)  # 4096 x 128
    c = jnp.pad(c, ((0, D_ZP - D_Z), (0, 0))).astype(jnp.bfloat16)  # 128 x 4096
    return dict(a=a, c=c, bp=bp.reshape(1, D_IN).astype(jnp.float32))


# ---------------------------------------------------------------------------
# Pure-JAX float32 reference: the ORIGINAL (unfolded) 4-layer forward.
# ---------------------------------------------------------------------------
def autoencoder1_reference(x_nchw, p):
    B = x_nchw.shape[0]
    x = x_nchw.reshape(B, -1).astype(jnp.float32)
    h = x @ p["w1"] + p["b1"]
    z = h @ p["w2"] + p["b2"]
    h = z @ p["w3"] + p["b3"]
    y = h @ p["w4"] + p["b4"]
    return y.reshape(B, 1, 64, 64)


if __name__ == "__main__":
    root = jax.random.PRNGKey(0)
    k_params, k_x = jax.random.split(root)
    params = init_params(k_params)
    folded = fold_params(params)

    # Input implied by forward(): NCHW, 1 channel, 64x64 spatial (final .view).
    x = jax.random.normal(k_x, (2, 1, 64, 64), jnp.float32)

    out = jax.block_until_ready(autoencoder1_forward(x, folded))
    assert out.shape == (2, 1, 64, 64)
    assert bool(jnp.all(jnp.isfinite(out)))

    ref = jax.block_until_ready(autoencoder1_reference(x, params))
    max_err = float(jnp.max(jnp.abs(out - ref)))
    assert max_err < 5e-2, f"max abs error too large: {max_err}"

    print("KERNEL_OK")
</pallas_src>

<mosaic_0001>
module attributes {stable_mosaic.version = 11 : i64} {
  func.func @_folded_ae_kernel(%arg0: i32, %arg1: memref<8x4096xbf16, #tpu.memory_space<vmem>>, %arg2: memref<4096x128xbf16, #tpu.memory_space<vmem>>, %arg3: memref<128x1024xbf16, #tpu.memory_space<vmem>>, %arg4: memref<1x1024xf32, #tpu.memory_space<vmem>>, %arg5: memref<8x1024xf32, #tpu.memory_space<vmem>>) attributes {dimension_semantics = [#tpu.dimension_semantics<parallel>], iteration_bounds = array<i64: 4>, scalar_prefetch = 0 : i64, scratch_operands = 0 : i64, tpu.core_type = #tpu.core_type<tc>, window_params = [{pipeline_mode = #tpu.pipeline_mode<synchronous>, transform_indices = @transform_0, window_bounds = array<i64: 8, 4096>}, {pipeline_mode = #tpu.pipeline_mode<synchronous>, transform_indices = @transform_1, window_bounds = array<i64: 4096, 128>}, {transform_indices = @transform_2, window_bounds = array<i64: 128, 1024>}, {transform_indices = @transform_3, window_bounds = array<i64: 1, 1024>}, {transform_indices = @transform_4, window_bounds = array<i64: 8, 1024>}]} {
    %c0 = arith.constant 0 : index
    %c0_0 = arith.constant 0 : index
    %0 = vector.load %arg1[%c0, %c0_0] : memref<8x4096xbf16, #tpu.memory_space<vmem>>, vector<8x4096xbf16>
    %c0_1 = arith.constant 0 : index
    %c0_2 = arith.constant 0 : index
    %1 = vector.load %arg2[%c0_1, %c0_2] : memref<4096x128xbf16, #tpu.memory_space<vmem>>, vector<4096x128xbf16>
    %cst = arith.constant dense<0.000000e+00> : vector<8x128xf32>
    %2 = tpu.matmul %0, %1, %cst {dimension_numbers = #tpu.dot_dimension_numbers<[1], [0], [0], [1], [0, 0, 1, 1], [], []>} : vector<8x4096xbf16>, vector<4096x128xbf16>, vector<8x128xf32> -> vector<8x128xf32>
    %3 = arith.truncf %2 : vector<8x128xf32> to vector<8x128xbf16>
    %c0_3 = arith.constant 0 : index
    %c0_4 = arith.constant 0 : index
    %4 = vector.load %arg3[%c0_3, %c0_4] : memref<128x1024xbf16, #tpu.memory_space<vmem>>, vector<128x1024xbf16>
    %cst_5 = arith.constant dense<0.000000e+00> : vector<8x1024xf32>
    %5 = tpu.matmul %3, %4, %cst_5 {dimension_numbers = #tpu.dot_dimension_numbers<[1], [0], [0], [1], [0, 0, 1, 1], [], []>} : vector<8x128xbf16>, vector<128x1024xbf16>, vector<8x1024xf32> -> vector<8x1024xf32>
    %c0_6 = arith.constant 0 : index
    %c0_7 = arith.constant 0 : index
    %6 = vector.load %arg4[%c0_6, %c0_7] : memref<1x1024xf32, #tpu.memory_space<vmem>>, vector<1x1024xf32>
    %7 = vector.broadcast %6 : vector<1x1024xf32> to vector<8x1024xf32>
    %8 = arith.addf %5, %7 : vector<8x1024xf32>
    %c0_8 = arith.constant 0 : index
    %c0_9 = arith.constant 0 : index
    %9 = vector.load %arg5[%c0_8, %c0_9] : memref<8x1024xf32, #tpu.memory_space<vmem>>, vector<8x1024xf32>
    tpu.vector_store %arg5[%c0_8, %c0_9], %8 {strides = array<i32>} : memref<8x1024xf32, #tpu.memory_space<vmem>>, vector<8x1024xf32>,
    return
  }
  func.func @transform_0(%arg0: i32) -> (i32, i32) {
    %c0_i32 = arith.constant 0 : i32
    %c0_i32_0 = arith.constant 0 : i32
    %c0_i32_1 = arith.constant 0 : i32
    return %c0_i32, %c0_i32_0 : i32, i32
  }
  func.func @transform_1(%arg0: i32) -> (i32, i32) {
    %c0_i32 = arith.constant 0 : i32
    %c0_i32_0 = arith.constant 0 : i32
    %c0_i32_1 = arith.constant 0 : i32
    return %c0_i32, %c0_i32_0 : i32, i32
  }
  func.func @transform_2(%arg0: i32) -> (i32, i32) {
    %c0_i32 = arith.constant 0 : i32
    %c0_i32_0 = arith.constant 0 : i32
    return %c0_i32, %arg0 : i32, i32
  }
  func.func @transform_3(%arg0: i32) -> (i32, i32) {
    %c0_i32 = arith.constant 0 : i32
    %c0_i32_0 = arith.constant 0 : i32
    return %c0_i32, %arg0 : i32, i32
  }
  func.func @transform_4(%arg0: i32) -> (i32, i32) {
    %c0_i32 = arith.constant 0 : i32
    %c0_i32_0 = arith.constant 0 : i32
    return %c0_i32, %arg0 : i32, i32
  }
}

</mosaic_0001>

<llo_original>
// kernel: autoencoder1_forward.1
$region0: #{autoencoder1_forward.1}
  #allocation0 [shape = 'u32[]', space=smem, size = 0x4, offset = 0x4, fixed_abs, tag = 'smem constant byte address 0x4 - core index']
  #allocation1 [shape = 'u32[144,128]{1,0:T(1,128)}', space=vmem, size = 0x12000, scoped, tag = 'internal scratch']
  %s0 = inlined_call_operand.vmem [shape: bf16[8,4096], index: 0, kind: input, shape index: {}]
  %s1 = inlined_call_operand.hbm [shape: bf16[4096,128], index: 1, kind: input, shape index: {}]
  %s2 = inlined_call_operand.hbm [shape: bf16[128,4096], index: 2, kind: input, shape index: {}]
  %s3 = inlined_call_operand.vmem [shape: f32[1,4096], index: 3, kind: input, shape index: {}]
  %s4 = inlined_call_operand.vmem [shape: f32[8,4096], index: 4, kind: output, shape index: {}]
  %s5 = sld [smem:[#allocation0]]
  $region57: #{autoencoder1_forward.1} parent=0
    _
  %s7 = ssub.s32 1, %s5
  %s8 = scalar_select 0, %s7, %s5
  $region1: #{autoencoder1_forward.1} parent=0
    #allocation2 [shape = 'u8[1048576]{0}', space=vmem, size = 0x100000, scoped, tag = 'input window, operand 1, single buffered']
    #allocation3 [shape = 's32[2]{0}', space=sflag, size = 0x8, scoped, tag = 'scoped memory for autoencoder1_forward.1']
    #allocation4 [shape = 'u8[524288]{0}', space=vmem, size = 0x80000, scoped, tag = 'input window, operand 2']
    #allocation5 [shape = 's32[2]{0}', space=sflag, size = 0x8, scoped, tag = 'scoped memory for autoencoder1_forward.1']
    %9 = vsyncpa [#allocation3], 0
    %10 = vsyncpa [#allocation5], 0
    %s11 = scalar_lea.sflag [#allocation5], 1
    %12 = vsyncpa %s11, 0
    loop: start=0, step=1, limit=6
    $region2: #{autoencoder1_forward.1} parent=1 // loop_pre_header
      _
    $region3: #{autoencoder1_forward.1} parent=1 // loop_header
      %s14 = sphi 0, %s18
      %p15 = scmp.ge.s32.totalorder %s14, 6
      %s22 = sphi 0, %s22
      %s24 = sphi 0, %s22
      %s25 = sphi 0, %s24
      %s39 = sphi 0, %s25
      %s43 = sphi 0, %s43
      %s45 = sphi 0, %s43
      %s46 = sphi 0, %s45
      %s60 = sphi 0, %s46
      %s66 = sphi 0, %s68
      %s69 = sphi 0, %s66
      %s70 = sphi 0, %s69
      %s86 = sphi 0, %s70
      %s92 = sphi 0, %s94
      %s95 = sphi 0, %s92
      %s96 = sphi 0, %s95
      %s112 = sphi 0, %s96
      %s118 = sphi 0, %s120
      %s121 = sphi 0, %s118
      %s122 = sphi 0, %s121
      %s138 = sphi 0, %s122
    $region4: #{autoencoder1_forward.1} parent=1 // loop_header_branch
      %17 = sbr.rel (%p15) target = $region8
    $region5: #{autoencoder1_forward.1} parent=1 // loop_body
      %s19 = ssub.s32 %s14, 1
      %s20 = ssub.s32 %s14, 2
      %s21 = sadd.s32 %s14, 1
      %s23 = sadd.s32 %s22, 1
      %p26 = scmp.eq.s32.totalorder %s14, 3
      %p27 = scmp.ne.s32.totalorder %s22, %s24
      %p28 = scmp.eq.s32.totalorder %s14, 0
      %p29 = por %p27, %p28
      %p30 = scmp.ne.s32.totalorder %s22, %s24
      %p31 = scmp.eq.s32.totalorder %s19, 3
      %p32 = por %p30, %p31
      %p33 = scmp.ne.s32.totalorder %s24, %s25
      %p34 = scmp.eq.s32.totalorder %s19, 0
      %p35 = por %p33, %p34
      %p36 = scmp.ne.s32.totalorder %s24, %s25
      %p37 = scmp.eq.s32.totalorder %s20, 3
      %p38 = por %p36, %p37
      %p40 = scmp.ne.s32.totalorder %s25, %s39
      %p41 = scmp.eq.s32.totalorder %s20, 0
      %p42 = por %p40, %p41
      %s44 = sadd.s32 %s43, 1
      %p47 = scmp.eq.s32.totalorder %s14, 3
      %p48 = scmp.ne.s32.totalorder %s43, %s45
      %p49 = scmp.eq.s32.totalorder %s14, 0
      %p50 = por %p48, %p49
      %p51 = scmp.ne.s32.totalorder %s43, %s45
      %p52 = scmp.eq.s32.totalorder %s19, 3
      %p53 = por %p51, %p52
      %p54 = scmp.ne.s32.totalorder %s45, %s46
      %p55 = scmp.eq.s32.totalorder %s19, 0
      %p56 = por %p54, %p55
      %p57 = scmp.ne.s32.totalorder %s45, %s46
      %p58 = scmp.eq.s32.totalorder %s20, 3
      %p59 = por %p57, %p58
      %p61 = scmp.ne.s32.totalorder %s46, %s60
      %p62 = scmp.eq.s32.totalorder %s20, 0
      %p63 = por %p61, %p62
      %s64 = ssub.s32 %s14, %s21
      %p65 = scmp.eq.s32.totalorder %s64, 0
      %s67 = sadd.s32 %s66, 1
      %s68 = scalar_select %p65, %s66, %s67
      %p71 = pneg %p65
      %p72 = scmp.eq.s32.totalorder %s14, 3
      %p73 = por %p71, %p72
      %p74 = scmp.ne.s32.totalorder %s66, %s69
      %p75 = scmp.eq.s32.totalorder %s14, 0
      %p76 = por %p74, %p75
      %p77 = scmp.ne.s32.totalorder %s66, %s69
      %p78 = scmp.eq.s32.totalorder %s19, 3
      %p79 = por %p77, %p78
      %p80 = scmp.ne.s32.totalorder %s69, %s70
      %p81 = scmp.eq.s32.totalorder %s19, 0
      %p82 = por %p80, %p81
      %p83 = scmp.ne.s32.totalorder %s69, %s70
      %p84 = scmp.eq.s32.totalorder %s20, 3
      %p85 = por %p83, %p84
      %p87 = scmp.ne.s32.totalorder %s70, %s86
      %p88 = scmp.eq.s32.totalorder %s20, 0
      %p89 = por %p87, %p88
      %s90 = ssub.s32 %s14, %s21
      %p91 = scmp.eq.s32.totalorder %s90, 0
      %s93 = sadd.s32 %s92, 1
      %s94 = scalar_select %p91, %s92, %s93
      %p97 = pneg %p91
      %p98 = scmp.eq.s32.totalorder %s14, 3
      %p99 = por %p97, %p98
      %p100 = scmp.ne.s32.totalorder %s92, %s95
      %p101 = scmp.eq.s32.totalorder %s14, 0
      %p102 = por %p100, %p101
      %p103 = scmp.ne.s32.totalorder %s92, %s95
      %p104 = scmp.eq.s32.totalorder %s19, 3
      %p105 = por %p103, %p104
      %p106 = scmp.ne.s32.totalorder %s95, %s96
      %p107 = scmp.eq.s32.totalorder %s19, 0
      %p108 = por %p106, %p107
      %p109 = scmp.ne.s32.totalorder %s95, %s96
      %p110 = scmp.eq.s32.totalorder %s20, 3
      %p111 = por %p109, %p110
      %p113 = scmp.ne.s32.totalorder %s96, %s112
      %p114 = scmp.eq.s32.totalorder %s20, 0
      %p115 = por %p113, %p114
      %s116 = ssub.s32 %s14, %s21
      %p117 = scmp.eq.s32.totalorder %s116, 0
      %s119 = sadd.s32 %s118, 1
      %s120 = scalar_select %p117, %s118, %s119
      %p123 = pneg %p117
      %p124 = scmp.eq.s32.totalorder %s14, 3
      %p125 = por %p123, %p124
      %p126 = scmp.ne.s32.totalorder %s118, %s121
      %p127 = scmp.eq.s32.totalorder %s14, 0
      %p128 = por %p126, %p127
      %p129 = scmp.ne.s32.totalorder %s118, %s121
      %p130 = scmp.eq.s32.totalorder %s19, 3
      %p131 = por %p129, %p130
      %p132 = scmp.ne.s32.totalorder %s121, %s122
      %p133 = scmp.eq.s32.totalorder %s19, 0
      %p134 = por %p132, %p133
      %p135 = scmp.ne.s32.totalorder %s121, %s122
      %p136 = scmp.eq.s32.totalorder %s20, 3
      %p137 = por %p135, %p136
      %p139 = scmp.ne.s32.totalorder %s122, %s138
      %p140 = scmp.eq.s32.totalorder %s20, 0
      %p141 = por %p139, %p140
      %p142 = scmp.le.s32.totalorder 1, %s14
      %p143 = scmp.lt.s32.totalorder %s14, 5
      %p144 = pnand %p142, %p143
      %p145 = pneg %p144
      // Predicated region
      $region9: #{autoencoder1_forward.1} parent=5 // pred_check
        _
      $region10: #{autoencoder1_forward.1} parent=5 // pred_check_branch
        %147 = sbr.rel (%p144) target = $region12
      $region11: #{autoencoder1_forward.1} parent=5 // pred_region
        %s148 = ssub.s32 %s14, 1
        // Predicated region
        $region13: #{autoencoder1_forward.1} parent=11 // pred_check
          %p149 = pneg %p35
        $region14: #{autoencoder1_forward.1} parent=11 // pred_check_branch
          %151 = sbr.rel (%p149) target = $region16
        $region15: #{autoencoder1_forward.1} parent=11 // pred_region
          _
        $region16: #{autoencoder1_forward.1} parent=11 // pred_fallthru
          _
        // Predicated region
        $region17: #{autoencoder1_forward.1} parent=11 // pred_check
          %p152 = pneg %p56
        $region18: #{autoencoder1_forward.1} parent=11 // pred_check_branch
          %154 = sbr.rel (%p152) target = $region20
        $region19: #{autoencoder1_forward.1} parent=11 // pred_region
          %s156 = ssub.s32 32768, 32768
          %157 = vsyncadd [#allocation3], %s156
          %s158 = sshll.u32 [#allocation2], 4
          %s159 = int_to_ptr.vmem [resolvable:$true] %s158
          %164 = dma.hbm_to_vmem [thread:$0]  %s1, 32768, %s159, [#allocation3], 64, 64, 4
        $region20: #{autoencoder1_forward.1} parent=11 // pred_fallthru
          _
      $region12: #{autoencoder1_forward.1} parent=5 // pred_fallthru
        _
      %p165 = scmp.lt.s32.totalorder %s14, 4
      // Predicated region
      $region21: #{autoencoder1_forward.1} parent=5 // pred_check
        %p166 = pneg %p165
      $region22: #{autoencoder1_forward.1} parent=5 // pred_check_branch
        %168 = sbr.rel (%p166) target = $region24
      $region23: #{autoencoder1_forward.1} parent=5 // pred_region
        // Predicated region
        $region25: #{autoencoder1_forward.1} parent=23 // pred_check
          %p169 = pneg %p76
        $region26: #{autoencoder1_forward.1} parent=23 // pred_check_branch
          %171 = sbr.rel (%p169) target = $region28
        $region27: #{autoencoder1_forward.1} parent=23 // pred_region
          %s172 = sand.u32 %s66, 1
          %s173 = scalar_lea.sflag [#allocation5], %s172
          %s174 = sand.u32 %s66, 1
          %s175 = smul.addr %s174, 512
          %s176 = scalar_lea.vmem [#allocation4], %s175
          %s177 = smul.u32 8, %s14
          %s179 = ssub.s32 8192, 8192
          %180 = vsyncadd %s173, %s179
          %s181 = smul.addr %s177, 64
          %s182 = scalar_lea.hbm %s2, %s181
          %s183 = sshll.u32 %s176, 4
          %s184 = int_to_ptr.vmem [resolvable:$true] %s183
          %189 = dma.hbm_to_vmem [thread:$0]  %s182, 8192, %s184, %s173, 2048, 512, 32
        $region28: #{autoencoder1_forward.1} parent=23 // pred_fallthru
          _
        // Predicated region
        $region29: #{autoencoder1_forward.1} parent=23 // pred_check
          %p190 = pneg %p102
        $region30: #{autoencoder1_forward.1} parent=23 // pred_check_branch
          %192 = sbr.rel (%p190) target = $region32
        $region31: #{autoencoder1_forward.1} parent=23 // pred_region
          %s193 = smul.u32 8, %s14
          %p194 = scmp.lt.s32.totalorder %s193, 31
          %s195 = scalar_select %p194, %s193, 31
          %s196 = scalar_lea.vmem %s3, %s195
          %s197 = smul.u32 8, %s14
        $region32: #{autoencoder1_forward.1} parent=23 // pred_fallthru
          _
      $region24: #{autoencoder1_forward.1} parent=5 // pred_fallthru
        _
      %p198 = scmp.le.s32.totalorder 1, %s14
      %p199 = scmp.lt.s32.totalorder %s14, 5
      %p200 = pnand %p198, %p199
      %p201 = pneg %p200
      // Predicated region
      $region33: #{autoencoder1_forward.1} parent=5 // pred_check
        _
      $region34: #{autoencoder1_forward.1} parent=5 // pred_check_branch
        %203 = sbr.rel (%p200) target = $region36
      $region35: #{autoencoder1_forward.1} parent=5 // pred_region
        %s204 = ssub.s32 %s14, 1
        // Predicated region
        $region37: #{autoencoder1_forward.1} parent=35 // pred_check
          %p205 = pneg %p56
        $region38: #{autoencoder1_forward.1} parent=35 // pred_check_branch
          %207 = sbr.rel (%p205) target = $region40
        $region39: #{autoencoder1_forward.1} parent=35 // pred_region
          %208 = dma.done [#allocation3], 32768
        $region40: #{autoencoder1_forward.1} parent=35 // pred_fallthru
          _
        %s209 = sand.u32 %s69, 1
        %s210 = scalar_lea.sflag [#allocation5], %s209
        %s211 = sand.u32 %s69, 1
        %s212 = smul.addr %s211, 512
        %s213 = scalar_lea.vmem [#allocation4], %s212
        // Predicated region
        $region41: #{autoencoder1_forward.1} parent=35 // pred_check
          %p214 = pneg %p82
        $region42: #{autoencoder1_forward.1} parent=35 // pred_check_branch
          %216 = sbr.rel (%p214) target = $region44
        $region43: #{autoencoder1_forward.1} parent=35 // pred_region
          %217 = dma.done %s210, 8192
        $region44: #{autoencoder1_forward.1} parent=35 // pred_fallthru
          _
        %p218 = pneg %p35
        %p219 = pneg %p32
        %p220 = pneg %p56
        %p221 = pneg %p53
        %s222 = sand.u32 %s69, 1
        %s223 = scalar_lea.sflag [#allocation5], %s222
        %s224 = sand.u32 %s69, 1
        %s225 = smul.addr %s224, 512
        %s226 = scalar_lea.vmem [#allocation4], %s225
        %p227 = pneg %p82
        %p228 = pneg %p79
        %s229 = smul.u32 8, %s19
        %p230 = scmp.lt.s32.totalorder %s229, 31
        %s231 = scalar_select %p230, %s229, 31
        %s232 = scalar_lea.vmem %s3, %s231
        %p233 = pneg %p108
        %p234 = pneg %p105
        %p235 = pneg %p134
        %p236 = pneg %p131
        %s237 = smul.u32 8, %s19
        %p238 = scmp.lt.s32.totalorder %s237, 31
        %s239 = scalar_select %p238, %s237, 31
        %s240 = smul.addr %s239, 8
        %s241 = scalar_lea.vmem %s4, %s240
        %s242 = smul.u32 8, %s19
        %s243 = smul.u32 8, %s19
        %p244 = scmp.lt.s32.totalorder %s243, 31
        %s245 = scalar_select %p244, %s243, 31
        %s246 = scalar_lea.vmem %s3, %s245
        %s247 = smul.u32 8, %s19
        %s248 = smul.u32 8, %s19
        %p249 = scmp.lt.s32.totalorder %s248, 31
        %s250 = scalar_select %p249, %s248, 31
        %s251 = smul.addr %s250, 8
        %s252 = scalar_lea.vmem %s4, %s251
        %s253 = smul.u32 8, %s19
        %v255 = vld [vmem:[%s0] sm:$0xff]
        %v256 = vld [vmem:[%s0 + $0x8] sm:$0xff]
        %v257 = vld [vmem:[%s0 + $0x10] sm:$0xff]
        %v258 = vld [vmem:[%s0 + $0x18] sm:$0xff]
        %v259 = vld [vmem:[%s0 + $0x20] sm:$0xff]
        %v260 = vld [vmem:[%s0 + $0x28] sm:$0xff]
        %v261 = vld [vmem:[%s0 + $0x30] sm:$0xff]
        %v262 = vld [vmem:[%s0 + $0x38] sm:$0xff]
        %v263 = vld [vmem:[%s0 + $0x40] sm:$0xff]
        %v264 = vld [vmem:[%s0 + $0x48] sm:$0xff]
        %v265 = vld [vmem:[%s0 + $0x50] sm:$0xff]
        %v266 = vld [vmem:[%s0 + $0x58] sm:$0xff]
        %v267 = vld [vmem:[%s0 + $0x60] sm:$0xff]
        %v268 = vld [vmem:[%s0 + $0x68] sm:$0xff]
        %v269 = vld [vmem:[%s0 + $0x70] sm:$0xff]
        %v270 = vld [vmem:[%s0 + $0x78] sm:$0xff]
        %v271 = vld [vmem:[#allocation2] sm:$0xf]
        %v272 = vld [vmem:[#allocation2 + $0x4] sm:$0xf]
        %v273 = vld [vmem:[#allocation2 + $0x8] sm:$0xf]
        %v274 = vld [vmem:[#allocation2 + $0xc] sm:$0xf]
        %v275 = vld [vmem:[#allocation2 + $0x10] sm:$0xf]
        %v276 = vld [vmem:[#allocation2 + $0x14] sm:$0xf]
        %v277 = vld [vmem:[#allocation2 + $0x18] sm:$0xf]
        %v278 = vld [vmem:[#allocation2 + $0x1c] sm:$0xf]
        %v279 = vld [vmem:[#allocation2 + $0x20] sm:$0xf]
        %v280 = vld [vmem:[#allocation2 + $0x24] sm:$0xf]
        %v281 = vld [vmem:[#allocation2 + $0x28] sm:$0xf]
        %v282 = vld [vmem:[#allocation2 + $0x2c] sm:$0xf]
        %v283 = vld [vmem:[#allocation2 + $0x30] sm:$0xf]
        %v284 = vld [vmem:[#allocation2 + $0x34] sm:$0xf]
        %v285 = vld [vmem:[#allocation2 + $0x38] sm:$0xf]
        %v286 = vld [vmem:[#allocation2 + $0x3c] sm:$0xf]
        %v287 = vld [vmem:[#allocation2 + $0x40] sm:$0xf]
        %v288 = vld [vmem:[#allocation2 + $0x44] sm:$0xf]
        %v289 = vld [vmem:[#allocation2 + $0x48] sm:$0xf]
        %v290 = vld [vmem:[#allocation2 + $0x4c] sm:$0xf]
        %v291 = vld [vmem:[#allocation2 + $0x50] sm:$0xf]
        %v292 = vld [vmem:[#allocation2 + $0x54] sm:$0xf]
        %v293 = vld [vmem:[#allocation2 + $0x58] sm:$0xf]
        %v294 = vld [vmem:[#allocation2 + $0x5c] sm:$0xf]
        %v295 = vld [vmem:[#allocation2 + $0x60] sm:$0xf]
        %v296 = vld [vmem:[#allocation2 + $0x64] sm:$0xf]
        %v297 = vld [vmem:[#allocation2 + $0x68] sm:$0xf]
        %v298 = vld [vmem:[#allocation2 + $0x6c] sm:$0xf]
        %v299 = vld [vmem:[#allocation2 + $0x70] sm:$0xf]
        %v300 = vld [vmem:[#allocation2 + $0x74] sm:$0xf]
        %v301 = vld [vmem:[#allocation2 + $0x78] sm:$0xf]
        %v302 = vld [vmem:[#allocation2 + $0x7c] sm:$0xf]
        %v303 = vld [vmem:[#allocation2 + $0x80] sm:$0xf]
        %v304 = vld [vmem:[#allocation2 + $0x84] sm:$0xf]
        %v305 = vld [vmem:[#allocation2 + $0x88] sm:$0xf]
        %v306 = vld [vmem:[#allocation2 + $0x8c] sm:$0xf]
        %v307 = vld [vmem:[#allocation2 + $0x90] sm:$0xf]
        %v308 = vld [vmem:[#allocation2 + $0x94] sm:$0xf]
        %v309 = vld [vmem:[#allocation2 + $0x98] sm:$0xf]
        %v310 = vld [vmem:[#allocation2 + $0x9c] sm:$0xf]
        %v311 = vld [vmem:[#allocation2 + $0xa0] sm:$0xf]
        %v312 = vld [vmem:[#allocation2 + $0xa4] sm:$0xf]
        %v313 = vld [vmem:[#allocation2 + $0xa8] sm:$0xf]
        %v314 = vld [vmem:[#allocation2 + $0xac] sm:$0xf]
        %v315 = vld [vmem:[#allocation2 + $0xb0] sm:$0xf]
        %v316 = vld [vmem:[#allocation2 + $0xb4] sm:$0xf]
        %v317 = vld [vmem:[#allocation2 + $0xb8] sm:$0xf]
        %v318 = vld [vmem:[#allocation2 + $0xbc] sm:$0xf]
        %v319 = vld [vmem:[#allocation2 + $0xc0] sm:$0xf]
        %v320 = vld [vmem:[#allocation2 + $0xc4] sm:$0xf]
        %v321 = vld [vmem:[#allocation2 + $0xc8] sm:$0xf]
        %v322 = vld [vmem:[#allocation2 + $0xcc] sm:$0xf]
        %v323 = vld [vmem:[#allocation2 + $0xd0] sm:$0xf]
        %v324 = vld [vmem:[#allocation2 + $0xd4] sm:$0xf]
        %v325 = vld [vmem:[#allocation2 + $0xd8] sm:$0xf]
        %v326 = vld [vmem:[#allocation2 + $0xdc] sm:$0xf]
        %v327 = vld [vmem:[#allocation2 + $0xe0] sm:$0xf]
        %v328 = vld [vmem:[#allocation2 + $0xe4] sm:$0xf]
        %v329 = vld [vmem:[#allocation2 + $0xe8] sm:$0xf]
        %v330 = vld [vmem:[#allocation2 + $0xec] sm:$0xf]
        %v331 = vld [vmem:[#allocation2 + $0xf0] sm:$0xf]
        %v332 = vld [vmem:[#allocation2 + $0xf4] sm:$0xf]
        %v333 = vld [vmem:[#allocation2 + $0xf8] sm:$0xf]
        %v334 = vld [vmem:[#allocation2 + $0xfc] sm:$0xf]
        %v335 = vld [vmem:[#allocation2 + $0x100] sm:$0xf]
        %v336 = vld [vmem:[#allocation2 + $0x104] sm:$0xf]
        %v337 = vld [vmem:[#allocation2 + $0x108] sm:$0xf]
        %v338 = vld [vmem:[#allocation2 + $0x10c] sm:$0xf]
        %v339 = vld [vmem:[#allocation2 + $0x110] sm:$0xf]
        %v340 = vld [vmem:[#allocation2 + $0x114] sm:$0xf]
        %v341 = vld [vmem:[#allocation2 + $0x118] sm:$0xf]
        %v342 = vld [vmem:[#allocation2 + $0x11c] sm:$0xf]
        %v343 = vld [vmem:[#allocation2 + $0x120] sm:$0xf]
        %v344 = vld [vmem:[#allocation2 + $0x124] sm:$0xf]
        %v345 = vld [vmem:[#allocation2 + $0x128] sm:$0xf]
        %v346 = vld [vmem:[#allocation2 + $0x12c] sm:$0xf]
        %v347 = vld [vmem:[#allocation2 + $0x130] sm:$0xf]
        %v348 = vld [vmem:[#allocation2 + $0x134] sm:$0xf]
        %v349 = vld [vmem:[#allocation2 + $0x138] sm:$0xf]
        %v350 = vld [vmem:[#allocation2 + $0x13c] sm:$0xf]
        %v351 = vld [vmem:[#allocation2 + $0x140] sm:$0xf]
        %v352 = vld [vmem:[#allocation2 + $0x144] sm:$0xf]
        %v353 = vld [vmem:[#allocation2 + $0x148] sm:$0xf]
        %v354 = vld [vmem:[#allocation2 + $0x14c] sm:$0xf]
        %v355 = vld [vmem:[#allocation2 + $0x150] sm:$0xf]
        %v356 = vld [vmem:[#allocation2 + $0x154] sm:$0xf]
        %v357 = vld [vmem:[#allocation2 + $0x158] sm:$0xf]
        %v358 = vld [vmem:[#allocation2 + $0x15c] sm:$0xf]
        %v359 = vld [vmem:[#allocation2 + $0x160] sm:$0xf]
        %v360 = vld [vmem:[#allocation2 + $0x164] sm:$0xf]
        %v361 = vld [vmem:[#allocation2 + $0x168] sm:$0xf]
        %v362 = vld [vmem:[#allocation2 + $0x16c] sm:$0xf]
        %v363 = vld [vmem:[#allocation2 + $0x170] sm:$0xf]
        %v364 = vld [vmem:[#allocation2 + $0x174] sm:$0xf]
        %v365 = vld [vmem:[#allocation2 + $0x178] sm:$0xf]
        %v366 = vld [vmem:[#allocation2 + $0x17c] sm:$0xf]
        %v367 = vld [vmem:[#allocation2 + $0x180] sm:$0xf]
        %v368 = vld [vmem:[#allocation2 + $0x184] sm:$0xf]
        %v369 = vld [vmem:[#allocation2 + $0x188] sm:$0xf]
        %v370 = vld [vmem:[#allocation2 + $0x18c] sm:$0xf]
        %v371 = vld [vmem:[#allocation2 + $0x190] sm:$0xf]
        %v372 = vld [vmem:[#allocation2 + $0x194] sm:$0xf]
        %v373 = vld [vmem:[#allocation2 + $0x198] sm:$0xf]
        %v374 = vld [vmem:[#allocation2 + $0x19c] sm:$0xf]
        %v375 = vld [vmem:[#allocation2 + $0x1a0] sm:$0xf]
        %v376 = vld [vmem:[#allocation2 + $0x1a4] sm:$0xf]
        %v377 = vld [vmem:[#allocation2 + $0x1a8] sm:$0xf]
        %v378 = vld [vmem:[#allocation2 + $0x1ac] sm:$0xf]
        %v379 = vld [vmem:[#allocation2 + $0x1b0] sm:$0xf]
        %v380 = vld [vmem:[#allocation2 + $0x1b4] sm:$0xf]
        %v381 = vld [vmem:[#allocation2 + $0x1b8] sm:$0xf]
        %v382 = vld [vmem:[#allocation2 + $0x1bc] sm:$0xf]
        %v383 = vld [vmem:[#allocation2 + $0x1c0] sm:$0xf]
        %v384 = vld [vmem:[#allocation2 + $0x1c4] sm:$0xf]
        %v385 = vld [vmem:[#allocation2 + $0x1c8] sm:$0xf]
        %v386 = vld [vmem:[#allocation2 + $0x1cc] sm:$0xf]
        %v387 = vld [vmem:[#allocation2 + $0x1d0] sm:$0xf]
        %v388 = vld [vmem:[#allocation2 + $0x1d4] sm:$0xf]
        %v389 = vld [vmem:[#allocation2 + $0x1d8] sm:$0xf]
        %v390 = vld [vmem:[#allocation2 + $0x1dc] sm:$0xf]
        %v391 = vld [vmem:[#allocation2 + $0x1e0] sm:$0xf]
        %v392 = vld [vmem:[#allocation2 + $0x1e4] sm:$0xf]
        %v393 = vld [vmem:[#allocation2 + $0x1e8] sm:$0xf]
        %v394 = vld [vmem:[#allocation2 + $0x1ec] sm:$0xf]
        %v395 = vld [vmem:[#allocation2 + $0x1f0] sm:$0xf]
        %v396 = vld [vmem:[#allocation2 + $0x1f4] sm:$0xf]
        %v397 = vld [vmem:[#allocation2 + $0x1f8] sm:$0xf]
        %v398 = vld [vmem:[#allocation2 + $0x1fc] sm:$0xf]
        %v399 = vld [vmem:[#allocation2 + $0x200] sm:$0xf]
        %v400 = vld [vmem:[#allocation2 + $0x204] sm:$0xf]
        %v401 = vld [vmem:[#allocation2 + $0x208] sm:$0xf]
        %v402 = vld [vmem:[#allocation2 + $0x20c] sm:$0xf]
        %v403 = vld [vmem:[#allocation2 + $0x210] sm:$0xf]
        %v404 = vld [vmem:[#allocation2 + $0x214] sm:$0xf]
        %v405 = vld [vmem:[#allocation2 + $0x218] sm:$0xf]
        %v406 = vld [vmem:[#allocation2 + $0x21c] sm:$0xf]
        %v407 = vld [vmem:[#allocation2 + $0x220] sm:$0xf]
        %v408 = vld [vmem:[#allocation2 + $0x224] sm:$0xf]
        %v409 = vld [vmem:[#allocation2 + $0x228] sm:$0xf]
        %v410 = vld [vmem:[#allocation2 + $0x22c] sm:$0xf]
        %v411 = vld [vmem:[#allocation2 + $0x230] sm:$0xf]
        %v412 = vld [vmem:[#allocation2 + $0x234] sm:$0xf]
        %v413 = vld [vmem:[#allocation2 + $0x238] sm:$0xf]
        %v414 = vld [vmem:[#allocation2 + $0x23c] sm:$0xf]
        %v415 = vld [vmem:[#allocation2 + $0x240] sm:$0xf]
        %v416 = vld [vmem:[#allocation2 + $0x244] sm:$0xf]
        %v417 = vld [vmem:[#allocation2 + $0x248] sm:$0xf]
        %v418 = vld [vmem:[#allocation2 + $0x24c] sm:$0xf]
        %v419 = vld [vmem:[#allocation2 + $0x250] sm:$0xf]
        %v420 = vld [vmem:[#allocation2 + $0x254] sm:$0xf]
        %v421 = vld [vmem:[#allocation2 + $0x258] sm:$0xf]
        %v422 = vld [vmem:[#allocation2 + $0x25c] sm:$0xf]
        %v423 = vld [vmem:[#allocation2 + $0x260] sm:$0xf]
        %v424 = vld [vmem:[#allocation2 + $0x264] sm:$0xf]
        %v425 = vld [vmem:[#allocation2 + $0x268] sm:$0xf]
        %v426 = vld [vmem:[#allocation2 + $0x26c] sm:$0xf]
        %v427 = vld [vmem:[#allocation2 + $0x270] sm:$0xf]
        %v428 = vld [vmem:[#allocation2 + $0x274] sm:$0xf]
        %v429 = vld [vmem:[#allocation2 + $0x278] sm:$0xf]
        %v430 = vld [vmem:[#allocation2 + $0x27c] sm:$0xf]
        %v431 = vld [vmem:[#allocation2 + $0x280] sm:$0xf]
        %v432 = vld [vmem:[#allocation2 + $0x284] sm:$0xf]
        %v433 = vld [vmem:[#allocation2 + $0x288] sm:$0xf]
        %v434 = vld [vmem:[#allocation2 + $0x28c] sm:$0xf]
        %v435 = vld [vmem:[#allocation2 + $0x290] sm:$0xf]
        %v436 = vld [vmem:[#allocation2 + $0x294] sm:$0xf]
        %v437 = vld [vmem:[#allocation2 + $0x298] sm:$0xf]
        %v438 = vld [vmem:[#allocation2 + $0x29c] sm:$0xf]
        %v439 = vld [vmem:[#allocation2 + $0x2a0] sm:$0xf]
        %v440 = vld [vmem:[#allocation2 + $0x2a4] sm:$0xf]
        %v441 = vld [vmem:[#allocation2 + $0x2a8] sm:$0xf]
        %v442 = vld [vmem:[#allocation2 + $0x2ac] sm:$0xf]
        %v443 = vld [vmem:[#allocation2 + $0x2b0] sm:$0xf]
        %v444 = vld [vmem:[#allocation2 + $0x2b4] sm:$0xf]
        %v445 = vld [vmem:[#allocation2 + $0x2b8] sm:$0xf]
        %v446 = vld [vmem:[#allocation2 + $0x2bc] sm:$0xf]
        %v447 = vld [vmem:[#allocation2 + $0x2c0] sm:$0xf]
        %v448 = vld [vmem:[#allocation2 + $0x2c4] sm:$0xf]
        %v449 = vld [vmem:[#allocation2 + $0x2c8] sm:$0xf]
        %v450 = vld [vmem:[#allocation2 + $0x2cc] sm:$0xf]
        %v451 = vld [vmem:[#allocation2 + $0x2d0] sm:$0xf]
        %v452 = vld [vmem:[#allocation2 + $0x2d4] sm:$0xf]
        %v453 = vld [vmem:[#allocation2 + $0x2d8] sm:$0xf]
        %v454 = vld [vmem:[#allocation2 + $0x2dc] sm:$0xf]
        %v455 = vld [vmem:[#allocation2 + $0x2e0] sm:$0xf]
        %v456 = vld [vmem:[#allocation2 + $0x2e4] sm:$0xf]
        %v457 = vld [vmem:[#allocation2 + $0x2e8] sm:$0xf]
        %v458 = vld [vmem:[#allocation2 + $0x2ec] sm:$0xf]
        %v459 = vld [vmem:[#allocation2 + $0x2f0] sm:$0xf]
        %v460 = vld [vmem:[#allocation2 + $0x2f4] sm:$0xf]
        %v461 = vld [vmem:[#allocation2 + $0x2f8] sm:$0xf]
        %v462 = vld [vmem:[#allocation2 + $0x2fc] sm:$0xf]
        %v463 = vld [vmem:[#allocation2 + $0x300] sm:$0xf]
        %v464 = vld [vmem:[#allocation2 + $0x304] sm:$0xf]
        %v465 = vld [vmem:[#allocation2 + $0x308] sm:$0xf]
        %v466 = vld [vmem:[#allocation2 + $0x30c] sm:$0xf]
        %v467 = vld [vmem:[#allocation2 + $0x310] sm:$0xf]
        %v468 = vld [vmem:[#allocation2 + $0x314] sm:$0xf]
        %v469 = vld [vmem:[#allocation2 + $0x318] sm:$0xf]
        %v470 = vld [vmem:[#allocation2 + $0x31c] sm:$0xf]
        %v471 = vld [vmem:[#allocation2 + $0x320] sm:$0xf]
        %v472 = vld [vmem:[#allocation2 + $0x324] sm:$0xf]
        %v473 = vld [vmem:[#allocation2 + $0x328] sm:$0xf]
        %v474 = vld [vmem:[#allocation2 + $0x32c] sm:$0xf]
        %v475 = vld [vmem:[#allocation2 + $0x330] sm:$0xf]
        %v476 = vld [vmem:[#allocation2 + $0x334] sm:$0xf]
        %v477 = vld [vmem:[#allocation2 + $0x338] sm:$0xf]
        %v478 = vld [vmem:[#allocation2 + $0x33c] sm:$0xf]
        %v479 = vld [vmem:[#allocation2 + $0x340] sm:$0xf]
        %v480 = vld [vmem:[#allocation2 + $0x344] sm:$0xf]
        %v481 = vld [vmem:[#allocation2 + $0x348] sm:$0xf]
        %v482 = vld [vmem:[#allocation2 + $0x34c] sm:$0xf]
        %v483 = vld [vmem:[#allocation2 + $0x350] sm:$0xf]
        %v484 = vld [vmem:[#allocation2 + $0x354] sm:$0xf]
        %v485 = vld [vmem:[#allocation2 + $0x358] sm:$0xf]
        %v486 = vld [vmem:[#allocation2 + $0x35c] sm:$0xf]
        %v487 = vld [vmem:[#allocation2 + $0x360] sm:$0xf]
        %v488 = vld [vmem:[#allocation2 + $0x364] sm:$0xf]
        %v489 = vld [vmem:[#allocation2 + $0x368] sm:$0xf]
        %v490 = vld [vmem:[#allocation2 + $0x36c] sm:$0xf]
        %v491 = vld [vmem:[#allocation2 + $0x370] sm:$0xf]
        %v492 = vld [vmem:[#allocation2 + $0x374] sm:$0xf]
        %v493 = vld [vmem:[#allocation2 + $0x378] sm:$0xf]
        %v494 = vld [vmem:[#allocation2 + $0x37c] sm:$0xf]
        %v495 = vld [vmem:[#allocation2 + $0x380] sm:$0xf]
        %v496 = vld [vmem:[#allocation2 + $0x384] sm:$0xf]
        %v497 = vld [vmem:[#allocation2 + $0x388] sm:$0xf]
        %v498 = vld [vmem:[#allocation2 + $0x38c] sm:$0xf]
        %v499 = vld [vmem:[#allocation2 + $0x390] sm:$0xf]
        %v500 = vld [vmem:[#allocation2 + $0x394] sm:$0xf]
        %v501 = vld [vmem:[#allocation2 + $0x398] sm:$0xf]
        %v502 = vld [vmem:[#allocation2 + $0x39c] sm:$0xf]
        %v503 = vld [vmem:[#allocation2 + $0x3a0] sm:$0xf]
        %v504 = vld [vmem:[#allocation2 + $0x3a4] sm:$0xf]
        %v505 = vld [vmem:[#allocation2 + $0x3a8] sm:$0xf]
        %v506 = vld [vmem:[#allocation2 + $0x3ac] sm:$0xf]
        %v507 = vld [vmem:[#allocation2 + $0x3b0] sm:$0xf]
        %v508 = vld [vmem:[#allocation2 + $0x3b4] sm:$0xf]
        %v509 = vld [vmem:[#allocation2 + $0x3b8] sm:$0xf]
        %v510 = vld [vmem:[#allocation2 + $0x3bc] sm:$0xf]
        %v511 = vld [vmem:[#allocation2 + $0x3c0] sm:$0xf]
        %v512 = vld [vmem:[#allocation2 + $0x3c4] sm:$0xf]
        %v513 = vld [vmem:[#allocation2 + $0x3c8] sm:$0xf]
        %v514 = vld [vmem:[#allocation2 + $0x3cc] sm:$0xf]
        %v515 = vld [vmem:[#allocation2 + $0x3d0] sm:$0xf]
        %v516 = vld [vmem:[#allocation2 + $0x3d4] sm:$0xf]
        %v517 = vld [vmem:[#allocation2 + $0x3d8] sm:$0xf]
        %v518 = vld [vmem:[#allocation2 + $0x3dc] sm:$0xf]
        %v519 = vld [vmem:[#allocation2 + $0x3e0] sm:$0xf]
        %v520 = vld [vmem:[#allocation2 + $0x3e4] sm:$0xf]
        %v521 = vld [vmem:[#allocation2 + $0x3e8] sm:$0xf]
        %v522 = vld [vmem:[#allocation2 + $0x3ec] sm:$0xf]
        %v523 = vld [vmem:[#allocation2 + $0x3f0] sm:$0xf]
        %v524 = vld [vmem:[#allocation2 + $0x3f4] sm:$0xf]
        %v525 = vld [vmem:[#allocation2 + $0x3f8] sm:$0xf]
        %v526 = vld [vmem:[#allocation2 + $0x3fc] sm:$0xf]
        %v527 = vld [vmem:[#allocation2 + $0x400] sm:$0xf]
        %v528 = vld [vmem:[#allocation2 + $0x404] sm:$0xf]
        %v529 = vld [vmem:[#allocation2 + $0x408] sm:$0xf]
        %v530 = vld [vmem:[#allocation2 + $0x40c] sm:$0xf]
        %v531 = vld [vmem:[#allocation2 + $0x410] sm:$0xf]
        %v532 = vld [vmem:[#allocation2 + $0x414] sm:$0xf]
        %v533 = vld [vmem:[#allocation2 + $0x418] sm:$0xf]
        %v534 = vld [vmem:[#allocation2 + $0x41c] sm:$0xf]
        %v535 = vld [vmem:[#allocation2 + $0x420] sm:$0xf]
        %v536 = vld [vmem:[#allocation2 + $0x424] sm:$0xf]
        %v537 = vld [vmem:[#allocation2 + $0x428] sm:$0xf]
        %v538 = vld [vmem:[#allocation2 + $0x42c] sm:$0xf]
        %v539 = vld [vmem:[#allocation2 + $0x430] sm:$0xf]
        %v540 = vld [vmem:[#allocation2 + $0x434] sm:$0xf]
        %v541 = vld [vmem:[#allocation2 + $0x438] sm:$0xf]
        %v542 = vld [vmem:[#allocation2 + $0x43c] sm:$0xf]
        %v543 = vld [vmem:[#allocation2 + $0x440] sm:$0xf]
        %v544 = vld [vmem:[#allocation2 + $0x444] sm:$0xf]
        %v545 = vld [vmem:[#allocation2 + $0x448] sm:$0xf]
        %v546 = vld [vmem:[#allocation2 + $0x44c] sm:$0xf]
        %v547 = vld [vmem:[#allocation2 + $0x450] sm:$0xf]
        %v548 = vld [vmem:[#allocation2 + $0x454] sm:$0xf]
        %v549 = vld [vmem:[#allocation2 + $0x458] sm:$0xf]
        %v550 = vld [vmem:[#allocation2 + $0x45c] sm:$0xf]
        %v551 = vld [vmem:[#allocation2 + $0x460] sm:$0xf]
        %v552 = vld [vmem:[#allocation2 + $0x464] sm:$0xf]
        %v553 = vld [vmem:[#allocation2 + $0x468] sm:$0xf]
        %v554 = vld [vmem:[#allocation2 + $0x46c] sm:$0xf]
        %v555 = vld [vmem:[#allocation2 + $0x470] sm:$0xf]
        %v556 = vld [vmem:[#allocation2 + $0x474] sm:$0xf]
        %v557 = vld [vmem:[#allocation2 + $0x478] sm:$0xf]
        %v558 = vld [vmem:[#allocation2 + $0x47c] sm:$0xf]
        %v559 = vld [vmem:[#allocation2 + $0x480] sm:$0xf]
        %v560 = vld [vmem:[#allocation2 + $0x484] sm:$0xf]
        %v561 = vld [vmem:[#allocation2 + $0x488] sm:$0xf]
        %v562 = vld [vmem:[#allocation2 + $0x48c] sm:$0xf]
        %v563 = vld [vmem:[#allocation2 + $0x490] sm:$0xf]
        %v564 = vld [vmem:[#allocation2 + $0x494] sm:$0xf]
        %v565 = vld [vmem:[#allocation2 + $0x498] sm:$0xf]
        %v566 = vld [vmem:[#allocation2 + $0x49c] sm:$0xf]
        %v567 = vld [vmem:[#allocation2 + $0x4a0] sm:$0xf]
        %v568 = vld [vmem:[#allocation2 + $0x4a4] sm:$0xf]
        %v569 = vld [vmem:[#allocation2 + $0x4a8] sm:$0xf]
        %v570 = vld [vmem:[#allocation2 + $0x4ac] sm:$0xf]
        %v571 = vld [vmem:[#allocation2 + $0x4b0] sm:$0xf]
        %v572 = vld [vmem:[#allocation2 + $0x4b4] sm:$0xf]
        %v573 = vld [vmem:[#allocation2 + $0x4b8] sm:$0xf]
        %v574 = vld [vmem:[#allocation2 + $0x4bc] sm:$0xf]
        %v575 = vld [vmem:[#allocation2 + $0x4c0] sm:$0xf]
        %v576 = vld [vmem:[#allocation2 + $0x4c4] sm:$0xf]
        %v577 = vld [vmem:[#allocation2 + $0x4c8] sm:$0xf]
        %v578 = vld [vmem:[#allocation2 + $0x4cc] sm:$0xf]
        %v579 = vld [vmem:[#allocation2 + $0x4d0] sm:$0xf]
        %v580 = vld [vmem:[#allocation2 + $0x4d4] sm:$0xf]
        %v581 = vld [vmem:[#allocation2 + $0x4d8] sm:$0xf]
        %v582 = vld [vmem:[#allocation2 + $0x4dc] sm:$0xf]
        %v583 = vld [vmem:[#allocation2 + $0x4e0] sm:$0xf]
        %v584 = vld [vmem:[#allocation2 + $0x4e4] sm:$0xf]
        %v585 = vld [vmem:[#allocation2 + $0x4e8] sm:$0xf]
        %v586 = vld [vmem:[#allocation2 + $0x4ec] sm:$0xf]
        %v587 = vld [vmem:[#allocation2 + $0x4f0] sm:$0xf]
        %v588 = vld [vmem:[#allocation2 + $0x4f4] sm:$0xf]
        %v589 = vld [vmem:[#allocation2 + $0x4f8] sm:$0xf]
        %v590 = vld [vmem:[#allocation2 + $0x4fc] sm:$0xf]
        %v591 = vld [vmem:[#allocation2 + $0x500] sm:$0xf]
        %v592 = vld [vmem:[#allocation2 + $0x504] sm:$0xf]
        %v593 = vld [vmem:[#allocation2 + $0x508] sm:$0xf]
        %v594 = vld [vmem:[#allocation2 + $0x50c] sm:$0xf]
        %v595 = vld [vmem:[#allocation2 + $0x510] sm:$0xf]
        %v596 = vld [vmem:[#allocation2 + $0x514] sm:$0xf]
        %v597 = vld [vmem:[#allocation2 + $0x518] sm:$0xf]
        %v598 = vld [vmem:[#allocation2 + $0x51c] sm:$0xf]
        %v599 = vld [vmem:[#allocation2 + $0x520] sm:$0xf]
        %v600 = vld [vmem:[#allocation2 + $0x524] sm:$0xf]
        %v601 = vld [vmem:[#allocation2 + $0x528] sm:$0xf]
        %v602 = vld [vmem:[#allocation2 + $0x52c] sm:$0xf]
        %v603 = vld [vmem:[#allocation2 + $0x530] sm:$0xf]
        %v604 = vld [vmem:[#allocation2 + $0x534] sm:$0xf]
        %v605 = vld [vmem:[#allocation2 + $0x538] sm:$0xf]
        %v606 = vld [vmem:[#allocation2 + $0x53c] sm:$0xf]
        %v607 = vld [vmem:[#allocation2 + $0x540] sm:$0xf]
        %v608 = vld [vmem:[#allocation2 + $0x544] sm:$0xf]
        %v609 = vld [vmem:[#allocation2 + $0x548] sm:$0xf]
        %v610 = vld [vmem:[#allocation2 + $0x54c] sm:$0xf]
        %v611 = vld [vmem:[#allocation2 + $0x550] sm:$0xf]
        %v612 = vld [vmem:[#allocation2 + $0x554] sm:$0xf]
        %v613 = vld [vmem:[#allocation2 + $0x558] sm:$0xf]
        %v614 = vld [vmem:[#allocation2 + $0x55c] sm:$0xf]
        %v615 = vld [vmem:[#allocation2 + $0x560] sm:$0xf]
        %v616 = vld [vmem:[#allocation2 + $0x564] sm:$0xf]
        %v617 = vld [vmem:[#allocation2 + $0x568] sm:$0xf]
        %v618 = vld [vmem:[#allocation2 + $0x56c] sm:$0xf]
        %v619 = vld [vmem:[#allocation2 + $0x570] sm:$0xf]
        %v620 = vld [vmem:[#allocation2 + $0x574] sm:$0xf]
        %v621 = vld [vmem:[#allocation2 + $0x578] sm:$0xf]
        %v622 = vld [vmem:[#allocation2 + $0x57c] sm:$0xf]
        %v623 = vld [vmem:[#allocation2 + $0x580] sm:$0xf]
        %v624 = vld [vmem:[#allocation2 + $0x584] sm:$0xf]
        %v625 = vld [vmem:[#allocation2 + $0x588] sm:$0xf]
        %v626 = vld [vmem:[#allocation2 + $0x58c] sm:$0xf]
        %v627 = vld [vmem:[#allocation2 + $0x590] sm:$0xf]
        %v628 = vld [vmem:[#allocation2 + $0x594] sm:$0xf]
        %v629 = vld [vmem:[#allocation2 + $0x598] sm:$0xf]
        %v630 = vld [vmem:[#allocation2 + $0x59c] sm:$0xf]
        %v631 = vld [vmem:[#allocation2 + $0x5a0] sm:$0xf]
        %v632 = vld [vmem:[#allocation2 + $0x5a4] sm:$0xf]
        %v633 = vld [vmem:[#allocation2 + $0x5a8] sm:$0xf]
        %v634 = vld [vmem:[#allocation2 + $0x5ac] sm:$0xf]
        %v635 = vld [vmem:[#allocation2 + $0x5b0] sm:$0xf]
        %v636 = vld [vmem:[#allocation2 + $0x5b4] sm:$0xf]
        %v637 = vld [vmem:[#allocation2 + $0x5b8] sm:$0xf]
        %v638 = vld [vmem:[#allocation2 + $0x5bc] sm:$0xf]
        %v639 = vld [vmem:[#allocation2 + $0x5c0] sm:$0xf]
        %v640 = vld [vmem:[#allocation2 + $0x5c4] sm:$0xf]
        %v641 = vld [vmem:[#allocation2 + $0x5c8] sm:$0xf]
        %v642 = vld [vmem:[#allocation2 + $0x5cc] sm:$0xf]
        %v643 = vld [vmem:[#allocation2 + $0x5d0] sm:$0xf]
        %v644 = vld [vmem:[#allocation2 + $0x5d4] sm:$0xf]
        %v645 = vld [vmem:[#allocation2 + $0x5d8] sm:$0xf]
        %v646 = vld [vmem:[#allocation2 + $0x5dc] sm:$0xf]
        %v647 = vld [vmem:[#allocation2 + $0x5e0] sm:$0xf]
        %v648 = vld [vmem:[#allocation2 + $0x5e4] sm:$0xf]
        %v649 = vld [vmem:[#allocation2 + $0x5e8] sm:$0xf]
        %v650 = vld [vmem:[#allocation2 + $0x5ec] sm:$0xf]
        %v651 = vld [vmem:[#allocation2 + $0x5f0] sm:$0xf]
        %v652 = vld [vmem:[#allocation2 + $0x5f4] sm:$0xf]
        %v653 = vld [vmem:[#allocation2 + $0x5f8] sm:$0xf]
        %v654 = vld [vmem:[#allocation2 + $0x5fc] sm:$0xf]
        %v655 = vld [vmem:[#allocation2 + $0x600] sm:$0xf]
        %v656 = vld [vmem:[#allocation2 + $0x604] sm:$0xf]
        %v657 = vld [vmem:[#allocation2 + $0x608] sm:$0xf]
        %v658 = vld [vmem:[#allocation2 + $0x60c] sm:$0xf]
        %v659 = vld [vmem:[#allocation2 + $0x610] sm:$0xf]
        %v660 = vld [vmem:[#allocation2 + $0x614] sm:$0xf]
        %v661 = vld [vmem:[#allocation2 + $0x618] sm:$0xf]
        %v662 = vld [vmem:[#allocation2 + $0x61c] sm:$0xf]
        %v663 = vld [vmem:[#allocation2 + $0x620] sm:$0xf]
        %v664 = vld [vmem:[#allocation2 + $0x624] sm:$0xf]
        %v665 = vld [vmem:[#allocation2 + $0x628] sm:$0xf]
        %v666 = vld [vmem:[#allocation2 + $0x62c] sm:$0xf]
        %v667 = vld [vmem:[#allocation2 + $0x630] sm:$0xf]
        %v668 = vld [vmem:[#allocation2 + $0x634] sm:$0xf]
        %v669 = vld [vmem:[#allocation2 + $0x638] sm:$0xf]
        %v670 = vld [vmem:[#allocation2 + $0x63c] sm:$0xf]
        %v671 = vld [vmem:[#allocation2 + $0x640] sm:$0xf]
        %v672 = vld [vmem:[#allocation2 + $0x644] sm:$0xf]
        %v673 = vld [vmem:[#allocation2 + $0x648] sm:$0xf]
        %v674 = vld [vmem:[#allocation2 + $0x64c] sm:$0xf]
        %v675 = vld [vmem:[#allocation2 + $0x650] sm:$0xf]
        %v676 = vld [vmem:[#allocation2 + $0x654] sm:$0xf]
        %v677 = vld [vmem:[#allocation2 + $0x658] sm:$0xf]
        %v678 = vld [vmem:[#allocation2 + $0x65c] sm:$0xf]
        %v679 = vld [vmem:[#allocation2 + $0x660] sm:$0xf]
        %v680 = vld [vmem:[#allocation2 + $0x664] sm:$0xf]
        %v681 = vld [vmem:[#allocation2 + $0x668] sm:$0xf]
        %v682 = vld [vmem:[#allocation2 + $0x66c] sm:$0xf]
        %v683 = vld [vmem:[#allocation2 + $0x670] sm:$0xf]
        %v684 = vld [vmem:[#allocation2 + $0x674] sm:$0xf]
        %v685 = vld [vmem:[#allocation2 + $0x678] sm:$0xf]
        %v686 = vld [vmem:[#allocation2 + $0x67c] sm:$0xf]
        %v687 = vld [vmem:[#allocation2 + $0x680] sm:$0xf]
        %v688 = vld [vmem:[#allocation2 + $0x684] sm:$0xf]
        %v689 = vld [vmem:[#allocation2 + $0x688] sm:$0xf]
        %v690 = vld [vmem:[#allocation2 + $0x68c] sm:$0xf]
        %v691 = vld [vmem:[#allocation2 + $0x690] sm:$0xf]
        %v692 = vld [vmem:[#allocation2 + $0x694] sm:$0xf]
        %v693 = vld [vmem:[#allocation2 + $0x698] sm:$0xf]
        %v694 = vld [vmem:[#allocation2 + $0x69c] sm:$0xf]
        %v695 = vld [vmem:[#allocation2 + $0x6a0] sm:$0xf]
        %v696 = vld [vmem:[#allocation2 + $0x6a4] sm:$0xf]
        %v697 = vld [vmem:[#allocation2 + $0x6a8] sm:$0xf]
        %v698 = vld [vmem:[#allocation2 + $0x6ac] sm:$0xf]
        %v699 = vld [vmem:[#allocation2 + $0x6b0] sm:$0xf]
        %v700 = vld [vmem:[#allocation2 + $0x6b4] sm:$0xf]
        %v701 = vld [vmem:[#allocation2 + $0x6b8] sm:$0xf]
        %v702 = vld [vmem:[#allocation2 + $0x6bc] sm:$0xf]
        %v703 = vld [vmem:[#allocation2 + $0x6c0] sm:$0xf]
        %v704 = vld [vmem:[#allocation2 + $0x6c4] sm:$0xf]
        %v705 = vld [vmem:[#allocation2 + $0x6c8] sm:$0xf]
        %v706 = vld [vmem:[#allocation2 + $0x6cc] sm:$0xf]
        %v707 = vld [vmem:[#allocation2 + $0x6d0] sm:$0xf]
        %v708 = vld [vmem:[#allocation2 + $0x6d4] sm:$0xf]
        %v709 = vld [vmem:[#allocation2 + $0x6d8] sm:$0xf]
        %v710 = vld [vmem:[#allocation2 + $0x6dc] sm:$0xf]
        %v711 = vld [vmem:[#allocation2 + $0x6e0] sm:$0xf]
        %v712 = vld [vmem:[#allocation2 + $0x6e4] sm:$0xf]
        %v713 = vld [vmem:[#allocation2 + $0x6e8] sm:$0xf]
        %v714 = vld [vmem:[#allocation2 + $0x6ec] sm:$0xf]
        %v715 = vld [vmem:[#allocation2 + $0x6f0] sm:$0xf]
        %v716 = vld [vmem:[#allocation2 + $0x6f4] sm:$0xf]
        %v717 = vld [vmem:[#allocation2 + $0x6f8] sm:$0xf]
        %v718 = vld [vmem:[#allocation2 + $0x6fc] sm:$0xf]
        %v719 = vld [vmem:[#allocation2 + $0x700] sm:$0xf]
        %v720 = vld [vmem:[#allocation2 + $0x704] sm:$0xf]
        %v721 = vld [vmem:[#allocation2 + $0x708] sm:$0xf]
        %v722 = vld [vmem:[#allocation2 + $0x70c] sm:$0xf]
        %v723 = vld [vmem:[#allocation2 + $0x710] sm:$0xf]
        %v724 = vld [vmem:[#allocation2 + $0x714] sm:$0xf]
        %v725 = vld [vmem:[#allocation2 + $0x718] sm:$0xf]
        %v726 = vld [vmem:[#allocation2 + $0x71c] sm:$0xf]
        %v727 = vld [vmem:[#allocation2 + $0x720] sm:$0xf]
        %v728 = vld [vmem:[#allocation2 + $0x724] sm:$0xf]
        %v729 = vld [vmem:[#allocation2 + $0x728] sm:$0xf]
        %v730 = vld [vmem:[#allocation2 + $0x72c] sm:$0xf]
        %v731 = vld [vmem:[#allocation2 + $0x730] sm:$0xf]
        %v732 = vld [vmem:[#allocation2 + $0x734] sm:$0xf]
        %v733 = vld [vmem:[#allocation2 + $0x738] sm:$0xf]
        %v734 = vld [vmem:[#allocation2 + $0x73c] sm:$0xf]
        %v735 = vld [vmem:[#allocation2 + $0x740] sm:$0xf]
        %v736 = vld [vmem:[#allocation2 + $0x744] sm:$0xf]
        %v737 = vld [vmem:[#allocation2 + $0x748] sm:$0xf]
        %v738 = vld [vmem:[#allocation2 + $0x74c] sm:$0xf]
        %v739 = vld [vmem:[#allocation2 + $0x750] sm:$0xf]
        %v740 = vld [vmem:[#allocation2 + $0x754] sm:$0xf]
        %v741 = vld [vmem:[#allocation2 + $0x758] sm:$0xf]
        %v742 = vld [vmem:[#allocation2 + $0x75c] sm:$0xf]
        %v743 = vld [vmem:[#allocation2 + $0x760] sm:$0xf]
        %v744 = vld [vmem:[#allocation2 + $0x764] sm:$0xf]
        %v745 = vld [vmem:[#allocation2 + $0x768] sm:$0xf]
        %v746 = vld [vmem:[#allocation2 + $0x76c] sm:$0xf]
        %v747 = vld [vmem:[#allocation2 + $0x770] sm:$0xf]
        %v748 = vld [vmem:[#allocation2 + $0x774] sm:$0xf]
        %v749 = vld [vmem:[#allocation2 + $0x778] sm:$0xf]
        %v750 = vld [vmem:[#allocation2 + $0x77c] sm:$0xf]
        %v751 = vld [vmem:[#allocation2 + $0x780] sm:$0xf]
        %v752 = vld [vmem:[#allocation2 + $0x784] sm:$0xf]
        %v753 = vld [vmem:[#allocation2 + $0x788] sm:$0xf]
        %v754 = vld [vmem:[#allocation2 + $0x78c] sm:$0xf]
        %v755 = vld [vmem:[#allocation2 + $0x790] sm:$0xf]
        %v756 = vld [vmem:[#allocation2 + $0x794] sm:$0xf]
        %v757 = vld [vmem:[#allocation2 + $0x798] sm:$0xf]
        %v758 = vld [vmem:[#allocation2 + $0x79c] sm:$0xf]
        %v759 = vld [vmem:[#allocation2 + $0x7a0] sm:$0xf]
        %v760 = vld [vmem:[#allocation2 + $0x7a4] sm:$0xf]
        %v761 = vld [vmem:[#allocation2 + $0x7a8] sm:$0xf]
        %v762 = vld [vmem:[#allocation2 + $0x7ac] sm:$0xf]
        %v763 = vld [vmem:[#allocation2 + $0x7b0] sm:$0xf]
        %v764 = vld [vmem:[#allocation2 + $0x7b4] sm:$0xf]
        %v765 = vld [vmem:[#allocation2 + $0x7b8] sm:$0xf]
        %v766 = vld [vmem:[#allocation2 + $0x7bc] sm:$0xf]
        %v767 = vld [vmem:[#allocation2 + $0x7c0] sm:$0xf]
        %v768 = vld [vmem:[#allocation2 + $0x7c4] sm:$0xf]
        %v769 = vld [vmem:[#allocation2 + $0x7c8] sm:$0xf]
        %v770 = vld [vmem:[#allocation2 + $0x7cc] sm:$0xf]
        %v771 = vld [vmem:[#allocation2 + $0x7d0] sm:$0xf]
        %v772 = vld [vmem:[#allocation2 + $0x7d4] sm:$0xf]
        %v773 = vld [vmem:[#allocation2 + $0x7d8] sm:$0xf]
        %v774 = vld [vmem:[#allocation2 + $0x7dc] sm:$0xf]
        %v775 = vld [vmem:[#allocation2 + $0x7e0] sm:$0xf]
        %v776 = vld [vmem:[#allocation2 + $0x7e4] sm:$0xf]
        %v777 = vld [vmem:[#allocation2 + $0x7e8] sm:$0xf]
        %v778 = vld [vmem:[#allocation2 + $0x7ec] sm:$0xf]
        %v779 = vld [vmem:[#allocation2 + $0x7f0] sm:$0xf]
        %v780 = vld [vmem:[#allocation2 + $0x7f4] sm:$0xf]
        %v781 = vld [vmem:[#allocation2 + $0x7f8] sm:$0xf]
        %v782 = vld [vmem:[#allocation2 + $0x7fc] sm:$0xf]
        %v799 = vunpack.c.l.b16 %v255
        %v800 = vunpack.c.h.b16 %v255
        %v801 = vunpack.c.l.b16 %v256
        %v802 = vunpack.c.h.b16 %v256
        %v803 = vunpack.c.l.b16 %v257
        %v804 = vunpack.c.h.b16 %v257
        %v805 = vunpack.c.l.b16 %v258
        %v806 = vunpack.c.h.b16 %v258
        %v807 = vunpack.c.l.b16 %v259
        %v808 = vunpack.c.h.b16 %v259
        %v809 = vunpack.c.l.b16 %v260
        %v810 = vunpack.c.h.b16 %v260
        %v811 = vunpack.c.l.b16 %v261
        %v812 = vunpack.c.h.b16 %v261
        %v813 = vunpack.c.l.b16 %v262
        %v814 = vunpack.c.h.b16 %v262
        %v815 = vunpack.c.l.b16 %v263
        %v816 = vunpack.c.h.b16 %v263
        %v817 = vunpack.c.l.b16 %v264
        %v818 = vunpack.c.h.b16 %v264
        %v819 = vunpack.c.l.b16 %v265
        %v820 = vunpack.c.h.b16 %v265
        %v821 = vunpack.c.l.b16 %v266
        %v822 = vunpack.c.h.b16 %v266
        %v823 = vunpack.c.l.b16 %v267
        %v824 = vunpack.c.h.b16 %v267
        %v825 = vunpack.c.l.b16 %v268
        %v826 = vunpack.c.h.b16 %v268
        %v827 = vunpack.c.l.b16 %v269
        %v828 = vunpack.c.h.b16 %v269
        %v829 = vunpack.c.l.b16 %v270
        %v830 = vunpack.c.h.b16 %v270
        %v831 = vpack.c.b16 %v799, %v799
        %v832 = vpack.c.b16 %v800, %v800
        %v833 = vpack.c.b16 %v801, %v801
        %v834 = vpack.c.b16 %v802, %v802
        %v835 = vpack.c.b16 %v803, %v803
        %v836 = vpack.c.b16 %v804, %v804
        %v837 = vpack.c.b16 %v805, %v805
        %v838 = vpack.c.b16 %v806, %v806
        %v839 = vpack.c.b16 %v807, %v807
        %v840 = vpack.c.b16 %v808, %v808
        %v841 = vpack.c.b16 %v809, %v809
        %v842 = vpack.c.b16 %v810, %v810
        %v843 = vpack.c.b16 %v811, %v811
        %v844 = vpack.c.b16 %v812, %v812
        %v845 = vpack.c.b16 %v813, %v813
        %v846 = vpack.c.b16 %v814, %v814
        %v847 = vpack.c.b16 %v815, %v815
        %v848 = vpack.c.b16 %v816, %v816
        %v849 = vpack.c.b16 %v817, %v817
        %v850 = vpack.c.b16 %v818, %v818
        %v851 = vpack.c.b16 %v819, %v819
        %v852 = vpack.c.b16 %v820, %v820
        %v853 = vpack.c.b16 %v821, %v821
        %v854 = vpack.c.b16 %v822, %v822
        %v855 = vpack.c.b16 %v823, %v823
        %v856 = vpack.c.b16 %v824, %v824
        %v857 = vpack.c.b16 %v825, %v825
        %v858 = vpack.c.b16 %v826, %v826
        %v859 = vpack.c.b16 %v827, %v827
        %v860 = vpack.c.b16 %v828, %v828
        %v861 = vpack.c.b16 %v829, %v829
        %v862 = vpack.c.b16 %v830, %v830
        %v1407 = vunpack.c.l.b16 %v271
        %v1408 = vunpack.c.l.b16 %v272
        %v1409 = vunpack.c.l.b16 %v273
        %v1410 = vunpack.c.l.b16 %v274
        %v1411 = vunpack.c.l.b16 %v275
        %v1412 = vunpack.c.l.b16 %v276
        %v1413 = vunpack.c.l.b16 %v277
        %v1414 = vunpack.c.l.b16 %v278
        %v1415 = vunpack.c.l.b16 %v279
        %v1416 = vunpack.c.l.b16 %v280
        %v1417 = vunpack.c.l.b16 %v281
        %v1418 = vunpack.c.l.b16 %v282
        %v1419 = vunpack.c.l.b16 %v283
        %v1420 = vunpack.c.l.b16 %v284
        %v1421 = vunpack.c.l.b16 %v285
        %v1422 = vunpack.c.l.b16 %v286
        %v1423 = vunpack.c.l.b16 %v287
        %v1424 = vunpack.c.l.b16 %v288
        %v1425 = vunpack.c.l.b16 %v289
        %v1426 = vunpack.c.l.b16 %v290
        %v1427 = vunpack.c.l.b16 %v291
        %v1428 = vunpack.c.l.b16 %v292
        %v1429 = vunpack.c.l.b16 %v293
        %v1430 = vunpack.c.l.b16 %v294
        %v1431 = vunpack.c.l.b16 %v295
        %v1432 = vunpack.c.l.b16 %v296
        %v1433 = vunpack.c.l.b16 %v297
        %v1434 = vunpack.c.l.b16 %v298
        %v1435 = vunpack.c.l.b16 %v299
        %v1436 = vunpack.c.l.b16 %v300
        %v1437 = vunpack.c.l.b16 %v301
        %v1438 = vunpack.c.l.b16 %v302
        %v1439 = vunpack.c.l.b16 %v303
        %v1440 = vunpack.c.l.b16 %v304
        %v1441 = vunpack.c.l.b16 %v305
        %v1442 = vunpack.c.l.b16 %v306
        %v1443 = vunpack.c.l.b16 %v307
        %v1444 = vunpack.c.l.b16 %v308
        %v1445 = vunpack.c.l.b16 %v309
        %v1446 = vunpack.c.l.b16 %v310
        %v1447 = vunpack.c.l.b16 %v311
        %v1448 = vunpack.c.l.b16 %v312
        %v1449 = vunpack.c.l.b16 %v313
        %v1450 = vunpack.c.l.b16 %v314
        %v1451 = vunpack.c.l.b16 %v315
        %v1452 = vunpack.c.l.b16 %v316
        %v1453 = vunpack.c.l.b16 %v317
        %v1454 = vunpack.c.l.b16 %v318
        %v1455 = vunpack.c.l.b16 %v319
        %v1456 = vunpack.c.l.b16 %v320
        %v1457 = vunpack.c.l.b16 %v321
        %v1458 = vunpack.c.l.b16 %v322
        %v1459 = vunpack.c.l.b16 %v323
        %v1460 = vunpack.c.l.b16 %v324
        %v1461 = vunpack.c.l.b16 %v325
        %v1462 = vunpack.c.l.b16 %v326
        %v1463 = vunpack.c.l.b16 %v327
        %v1464 = vunpack.c.l.b16 %v328
        %v1465 = vunpack.c.l.b16 %v329
        %v1466 = vunpack.c.l.b16 %v330
        %v1467 = vunpack.c.l.b16 %v331
        %v1468 = vunpack.c.l.b16 %v332
        %v1469 = vunpack.c.l.b16 %v333
        %v1470 = vunpack.c.l.b16 %v334
        %v1471 = vunpack.c.l.b16 %v335
        %v1472 = vunpack.c.l.b16 %v336
        %v1473 = vunpack.c.l.b16 %v337
        %v1474 = vunpack.c.l.b16 %v338
        %v1475 = vunpack.c.l.b16 %v339
        %v1476 = vunpack.c.l.b16 %v340
        %v1477 = vunpack.c.l.b16 %v341
        %v1478 = vunpack.c.l.b16 %v342
        %v1479 = vunpack.c.l.b16 %v343
        %v1480 = vunpack.c.l.b16 %v344
        %v1481 = vunpack.c.l.b16 %v345
        %v1482 = vunpack.c.l.b16 %v346
        %v1483 = vunpack.c.l.b16 %v347
        %v1484 = vunpack.c.l.b16 %v348
        %v1485 = vunpack.c.l.b16 %v349
        %v1486 = vunpack.c.l.b16 %v350
        %v1487 = vunpack.c.l.b16 %v351
        %v1488 = vunpack.c.l.b16 %v352
        %v1489 = vunpack.c.l.b16 %v353
        %v1490 = vunpack.c.l.b16 %v354
        %v1491 = vunpack.c.l.b16 %v355
        %v1492 = vunpack.c.l.b16 %v356
        %v1493 = vunpack.c.l.b16 %v357
        %v1494 = vunpack.c.l.b16 %v358
        %v1495 = vunpack.c.l.b16 %v359
        %v1496 = vunpack.c.l.b16 %v360
        %v1497 = vunpack.c.l.b16 %v361
        %v1498 = vunpack.c.l.b16 %v362
        %v1499 = vunpack.c.l.b16 %v363
        %v1500 = vunpack.c.l.b16 %v364
        %v1501 = vunpack.c.l.b16 %v365
        %v1502 = vunpack.c.l.b16 %v366
        %v1503 = vunpack.c.l.b16 %v367
        %v1504 = vunpack.c.l.b16 %v368
        %v1505 = vunpack.c.l.b16 %v369
        %v1506 = vunpack.c.l.b16 %v370
        %v1507 = vunpack.c.l.b16 %v371
        %v1508 = vunpack.c.l.b16 %v372
        %v1509 = vunpack.c.l.b16 %v373
        %v1510 = vunpack.c.l.b16 %v374
        %v1511 = vunpack.c.l.b16 %v375
        %v1512 = vunpack.c.l.b16 %v376
        %v1513 = vunpack.c.l.b16 %v377
        %v1514 = vunpack.c.l.b16 %v378
        %v1515 = vunpack.c.l.b16 %v379
        %v1516 = vunpack.c.l.b16 %v380
        %v1517 = vunpack.c.l.b16 %v381
        %v1518 = vunpack.c.l.b16 %v382
        %v1519 = vunpack.c.l.b16 %v383
        %v1520 = vunpack.c.l.b16 %v384
        %v1521 = vunpack.c.l.b16 %v385
        %v1522 = vunpack.c.l.b16 %v386
        %v1523 = vunpack.c.l.b16 %v387
        %v1524 = vunpack.c.l.b16 %v388
        %v1525 = vunpack.c.l.b16 %v389
        %v1526 = vunpack.c.l.b16 %v390
        %v1527 = vunpack.c.l.b16 %v391
        %v1528 = vunpack.c.l.b16 %v392
        %v1529 = vunpack.c.l.b16 %v393
        %v1530 = vunpack.c.l.b16 %v394
        %v1531 = vunpack.c.l.b16 %v395
        %v1532 = vunpack.c.l.b16 %v396
        %v1533 = vunpack.c.l.b16 %v397
        %v1534 = vunpack.c.l.b16 %v398
        %v1535 = vunpack.c.l.b16 %v399
        %v1536 = vunpack.c.l.b16 %v400
        %v1537 = vunpack.c.l.b16 %v401
        %v1538 = vunpack.c.l.b16 %v402
        %v1539 = vunpack.c.l.b16 %v403
        %v1540 = vunpack.c.l.b16 %v404
        %v1541 = vunpack.c.l.b16 %v405
        %v1542 = vunpack.c.l.b16 %v406
        %v1543 = vunpack.c.l.b16 %v407
        %v1544 = vunpack.c.l.b16 %v408
        %v1545 = vunpack.c.l.b16 %v409
        %v1546 = vunpack.c.l.b16 %v410
        %v1547 = vunpack.c.l.b16 %v411
        %v1548 = vunpack.c.l.b16 %v412
        %v1549 = vunpack.c.l.b16 %v413
        %v1550 = vunpack.c.l.b16 %v414
        %v1551 = vunpack.c.l.b16 %v415
        %v1552 = vunpack.c.l.b16 %v416
        %v1553 = vunpack.c.l.b16 %v417
        %v1554 = vunpack.c.l.b16 %v418
        %v1555 = vunpack.c.l.b16 %v419
        %v1556 = vunpack.c.l.b16 %v420
        %v1557 = vunpack.c.l.b16 %v421
        %v1558 = vunpack.c.l.b16 %v422
        %v1559 = vunpack.c.l.b16 %v423
        %v1560 = vunpack.c.l.b16 %v424
        %v1561 = vunpack.c.l.b16 %v425
        %v1562 = vunpack.c.l.b16 %v426
        %v1563 = vunpack.c.l.b16 %v427
        %v1564 = vunpack.c.l.b16 %v428
        %v1565 = vunpack.c.l.b16 %v429
        %v1566 = vunpack.c.l.b16 %v430
        %v1567 = vunpack.c.l.b16 %v431
        %v1568 = vunpack.c.l.b16 %v432
        %v1569 = vunpack.c.l.b16 %v433
        %v1570 = vunpack.c.l.b16 %v434
        %v1571 = vunpack.c.l.b16 %v435
        %v1572 = vunpack.c.l.b16 %v436
        %v1573 = vunpack.c.l.b16 %v437
        %v1574 = vunpack.c.l.b16 %v438
        %v1575 = vunpack.c.l.b16 %v439
        %v1576 = vunpack.c.l.b16 %v440
        %v1577 = vunpack.c.l.b16 %v441
        %v1578 = vunpack.c.l.b16 %v442
        %v1579 = vunpack.c.l.b16 %v443
        %v1580 = vunpack.c.l.b16 %v444
        %v1581 = vunpack.c.l.b16 %v445
        %v1582 = vunpack.c.l.b16 %v446
        %v1583 = vunpack.c.l.b16 %v447
        %v1584 = vunpack.c.l.b16 %v448
        %v1585 = vunpack.c.l.b16 %v449
        %v1586 = vunpack.c.l.b16 %v450
        %v1587 = vunpack.c.l.b16 %v451
        %v1588 = vunpack.c.l.b16 %v452
        %v1589 = vunpack.c.l.b16 %v453
        %v1590 = vunpack.c.l.b16 %v454
        %v1591 = vunpack.c.l.b16 %v455
        %v1592 = vunpack.c.l.b16 %v456
        %v1593 = vunpack.c.l.b16 %v457
        %v1594 = vunpack.c.l.b16 %v458
        %v1595 = vunpack.c.l.b16 %v459
        %v1596 = vunpack.c.l.b16 %v460
        %v1597 = vunpack.c.l.b16 %v461
        %v1598 = vunpack.c.l.b16 %v462
        %v1599 = vunpack.c.l.b16 %v463
        %v1600 = vunpack.c.l.b16 %v464
        %v1601 = vunpack.c.l.b16 %v465
        %v1602 = vunpack.c.l.b16 %v466
        %v1603 = vunpack.c.l.b16 %v467
        %v1604 = vunpack.c.l.b16 %v468
        %v1605 = vunpack.c.l.b16 %v469
        %v1606 = vunpack.c.l.b16 %v470
        %v1607 = vunpack.c.l.b16 %v471
        %v1608 = vunpack.c.l.b16 %v472
        %v1609 = vunpack.c.l.b16 %v473
        %v1610 = vunpack.c.l.b16 %v474
        %v1611 = vunpack.c.l.b16 %v475
        %v1612 = vunpack.c.l.b16 %v476
        %v1613 = vunpack.c.l.b16 %v477
        %v1614 = vunpack.c.l.b16 %v478
        %v1615 = vunpack.c.l.b16 %v479
        %v1616 = vunpack.c.l.b16 %v480
        %v1617 = vunpack.c.l.b16 %v481
        %v1618 = vunpack.c.l.b16 %v482
        %v1619 = vunpack.c.l.b16 %v483
        %v1620 = vunpack.c.l.b16 %v484
        %v1621 = vunpack.c.l.b16 %v485
        %v1622 = vunpack.c.l.b16 %v486
        %v1623 = vunpack.c.l.b16 %v487
        %v1624 = vunpack.c.l.b16 %v488
        %v1625 = vunpack.c.l.b16 %v489
        %v1626 = vunpack.c.l.b16 %v490
        %v1627 = vunpack.c.l.b16 %v491
        %v1628 = vunpack.c.l.b16 %v492
        %v1629 = vunpack.c.l.b16 %v493
        %v1630 = vunpack.c.l.b16 %v494
        %v1631 = vunpack.c.l.b16 %v495
        %v1632 = vunpack.c.l.b16 %v496
        %v1633 = vunpack.c.l.b16 %v497
        %v1634 = vunpack.c.l.b16 %v498
        %v1635 = vunpack.c.l.b16 %v499
        %v1636 = vunpack.c.l.b16 %v500
        %v1637 = vunpack.c.l.b16 %v501
        %v1638 = vunpack.c.l.b16 %v502
        %v1639 = vunpack.c.l.b16 %v503
        %v1640 = vunpack.c.l.b16 %v504
        %v1641 = vunpack.c.l.b16 %v505
        %v1642 = vunpack.c.l.b16 %v506
        %v1643 = vunpack.c.l.b16 %v507
        %v1644 = vunpack.c.l.b16 %v508
        %v1645 = vunpack.c.l.b16 %v509
        %v1646 = vunpack.c.l.b16 %v510
        %v1647 = vunpack.c.l.b16 %v511
        %v1648 = vunpack.c.l.b16 %v512
        %v1649 = vunpack.c.l.b16 %v513
        %v1650 = vunpack.c.l.b16 %v514
        %v1651 = vunpack.c.l.b16 %v515
        %v1652 = vunpack.c.l.b16 %v516
        %v1653 = vunpack.c.l.b16 %v517
        %v1654 = vunpack.c.l.b16 %v518
        %v1655 = vunpack.c.l.b16 %v519
        %v1656 = vunpack.c.l.b16 %v520
        %v1657 = vunpack.c.l.b16 %v521
        %v1658 = vunpack.c.l.b16 %v522
        %v1659 = vunpack.c.l.b16 %v523
        %v1660 = vunpack.c.l.b16 %v524
        %v1661 = vunpack.c.l.b16 %v525
        %v1662 = vunpack.c.l.b16 %v526
        %v1663 = vunpack.c.l.b16 %v527
        %v1664 = vunpack.c.l.b16 %v528
        %v1665 = vunpack.c.l.b16 %v529
        %v1666 = vunpack.c.l.b16 %v530
        %v1667 = vunpack.c.l.b16 %v531
        %v1668 = vunpack.c.l.b16 %v532
        %v1669 = vunpack.c.l.b16 %v533
        %v1670 = vunpack.c.l.b16 %v534
        %v1671 = vunpack.c.l.b16 %v535
        %v1672 = vunpack.c.l.b16 %v536
        %v1673 = vunpack.c.l.b16 %v537
        %v1674 = vunpack.c.l.b16 %v538
        %v1675 = vunpack.c.l.b16 %v539
        %v1676 = vunpack.c.l.b16 %v540
        %v1677 = vunpack.c.l.b16 %v541
        %v1678 = vunpack.c.l.b16 %v542
        %v1679 = vunpack.c.l.b16 %v543
        %v1680 = vunpack.c.l.b16 %v544
        %v1681 = vunpack.c.l.b16 %v545
        %v1682 = vunpack.c.l.b16 %v546
        %v1683 = vunpack.c.l.b16 %v547
        %v1684 = vunpack.c.l.b16 %v548
        %v1685 = vunpack.c.l.b16 %v549
        %v1686 = vunpack.c.l.b16 %v550
        %v1687 = vunpack.c.l.b16 %v551
        %v1688 = vunpack.c.l.b16 %v552
        %v1689 = vunpack.c.l.b16 %v553
        %v1690 = vunpack.c.l.b16 %v554
        %v1691 = vunpack.c.l.b16 %v555
        %v1692 = vunpack.c.l.b16 %v556
        %v1693 = vunpack.c.l.b16 %v557
        %v1694 = vunpack.c.l.b16 %v558
        %v1695 = vunpack.c.l.b16 %v559
        %v1696 = vunpack.c.l.b16 %v560
        %v1697 = vunpack.c.l.b16 %v561
        %v1698 = vunpack.c.l.b16 %v562
        %v1699 = vunpack.c.l.b16 %v563
        %v1700 = vunpack.c.l.b16 %v564
        %v1701 = vunpack.c.l.b16 %v565
        %v1702 = vunpack.c.l.b16 %v566
        %v1703 = vunpack.c.l.b16 %v567
        %v1704 = vunpack.c.l.b16 %v568
        %v1705 = vunpack.c.l.b16 %v569
        %v1706 = vunpack.c.l.b16 %v570
        %v1707 = vunpack.c.l.b16 %v571
        %v1708 = vunpack.c.l.b16 %v572
        %v1709 = vunpack.c.l.b16 %v573
        %v1710 = vunpack.c.l.b16 %v574
        %v1711 = vunpack.c.l.b16 %v575
        %v1712 = vunpack.c.l.b16 %v576
        %v1713 = vunpack.c.l.b16 %v577
        %v1714 = vunpack.c.l.b16 %v578
        %v1715 = vunpack.c.l.b16 %v579
        %v1716 = vunpack.c.l.b16 %v580
        %v1717 = vunpack.c.l.b16 %v581
        %v1718 = vunpack.c.l.b16 %v582
        %v1719 = vunpack.c.l.b16 %v583
        %v1720 = vunpack.c.l.b16 %v584
        %v1721 = vunpack.c.l.b16 %v585
        %v1722 = vunpack.c.l.b16 %v586
        %v1723 = vunpack.c.l.b16 %v587
        %v1724 = vunpack.c.l.b16 %v588
        %v1725 = vunpack.c.l.b16 %v589
        %v1726 = vunpack.c.l.b16 %v590
        %v1727 = vunpack.c.l.b16 %v591
        %v1728 = vunpack.c.l.b16 %v592
        %v1729 = vunpack.c.l.b16 %v593
        %v1730 = vunpack.c.l.b16 %v594
        %v1731 = vunpack.c.l.b16 %v595
        %v1732 = vunpack.c.l.b16 %v596
        %v1733 = vunpack.c.l.b16 %v597
        %v1734 = vunpack.c.l.b16 %v598
        %v1735 = vunpack.c.l.b16 %v599
        %v1736 = vunpack.c.l.b16 %v600
        %v1737 = vunpack.c.l.b16 %v601
        %v1738 = vunpack.c.l.b16 %v602
        %v1739 = vunpack.c.l.b16 %v603
        %v1740 = vunpack.c.l.b16 %v604
        %v1741 = vunpack.c.l.b16 %v605
        %v1742 = vunpack.c.l.b16 %v606
        %v1743 = vunpack.c.l.b16 %v607
        %v1744 = vunpack.c.l.b16 %v608
        %v1745 = vunpack.c.l.b16 %v609
        %v1746 = vunpack.c.l.b16 %v610
        %v1747 = vunpack.c.l.b16 %v611
        %v1748 = vunpack.c.l.b16 %v612
        %v1749 = vunpack.c.l.b16 %v613
        %v1750 = vunpack.c.l.b16 %v614
        %v1751 = vunpack.c.l.b16 %v615
        %v1752 = vunpack.c.l.b16 %v616
        %v1753 = vunpack.c.l.b16 %v617
        %v1754 = vunpack.c.l.b16 %v618
        %v1755 = vunpack.c.l.b16 %v619
        %v1756 = vunpack.c.l.b16 %v620
        %v1757 = vunpack.c.l.b16 %v621
        %v1758 = vunpack.c.l.b16 %v622
        %v1759 = vunpack.c.l.b16 %v623
        %v1760 = vunpack.c.l.b16 %v624
        %v1761 = vunpack.c.l.b16 %v625
        %v1762 = vunpack.c.l.b16 %v626
        %v1763 = vunpack.c.l.b16 %v627
        %v1764 = vunpack.c.l.b16 %v628
        %v1765 = vunpack.c.l.b16 %v629
        %v1766 = vunpack.c.l.b16 %v630
        %v1767 = vunpack.c.l.b16 %v631
        %v1768 = vunpack.c.l.b16 %v632
        %v1769 = vunpack.c.l.b16 %v633
        %v1770 = vunpack.c.l.b16 %v634
        %v1771 = vunpack.c.l.b16 %v635
        %v1772 = vunpack.c.l.b16 %v636
        %v1773 = vunpack.c.l.b16 %v637
        %v1774 = vunpack.c.l.b16 %v638
        %v1775 = vunpack.c.l.b16 %v639
        %v1776 = vunpack.c.l.b16 %v640
        %v1777 = vunpack.c.l.b16 %v641
        %v1778 = vunpack.c.l.b16 %v642
        %v1779 = vunpack.c.l.b16 %v643
        %v1780 = vunpack.c.l.b16 %v644
        %v1781 = vunpack.c.l.b16 %v645
        %v1782 = vunpack.c.l.b16 %v646
        %v1783 = vunpack.c.l.b16 %v647
        %v1784 = vunpack.c.l.b16 %v648
        %v1785 = vunpack.c.l.b16 %v649
        %v1786 = vunpack.c.l.b16 %v650
        %v1787 = vunpack.c.l.b16 %v651
        %v1788 = vunpack.c.l.b16 %v652
        %v1789 = vunpack.c.l.b16 %v653
        %v1790 = vunpack.c.l.b16 %v654
        %v1791 = vunpack.c.l.b16 %v655
        %v1792 = vunpack.c.l.b16 %v656
        %v1793 = vunpack.c.l.b16 %v657
        %v1794 = vunpack.c.l.b16 %v658
        %v1795 = vunpack.c.l.b16 %v659
        %v1796 = vunpack.c.l.b16 %v660
        %v1797 = vunpack.c.l.b16 %v661
        %v1798 = vunpack.c.l.b16 %v662
        %v1799 = vunpack.c.l.b16 %v663
        %v1800 = vunpack.c.l.b16 %v664
        %v1801 = vunpack.c.l.b16 %v665
        %v1802 = vunpack.c.l.b16 %v666
        %v1803 = vunpack.c.l.b16 %v667
        %v1804 = vunpack.c.l.b16 %v668
        %v1805 = vunpack.c.l.b16 %v669
        %v1806 = vunpack.c.l.b16 %v670
        %v1807 = vunpack.c.l.b16 %v671
        %v1808 = vunpack.c.l.b16 %v672
        %v1809 = vunpack.c.l.b16 %v673
        %v1810 = vunpack.c.l.b16 %v674
        %v1811 = vunpack.c.l.b16 %v675
        %v1812 = vunpack.c.l.b16 %v676
        %v1813 = vunpack.c.l.b16 %v677
        %v1814 = vunpack.c.l.b16 %v678
        %v1815 = vunpack.c.l.b16 %v679
        %v1816 = vunpack.c.l.b16 %v680
        %v1817 = vunpack.c.l.b16 %v681
        %v1818 = vunpack.c.l.b16 %v682
        %v1819 = vunpack.c.l.b16 %v683
        %v1820 = vunpack.c.l.b16 %v684
        %v1821 = vunpack.c.l.b16 %v685
        %v1822 = vunpack.c.l.b16 %v686
        %v1823 = vunpack.c.l.b16 %v687
        %v1824 = vunpack.c.l.b16 %v688
        %v1825 = vunpack.c.l.b16 %v689
        %v1826 = vunpack.c.l.b16 %v690
        %v1827 = vunpack.c.l.b16 %v691
        %v1828 = vunpack.c.l.b16 %v692
        %v1829 = vunpack.c.l.b16 %v693
        %v1830 = vunpack.c.l.b16 %v694
        %v1831 = vunpack.c.l.b16 %v695
        %v1832 = vunpack.c.l.b16 %v696
        %v1833 = vunpack.c.l.b16 %v697
        %v1834 = vunpack.c.l.b16 %v698
        %v1835 = vunpack.c.l.b16 %v699
        %v1836 = vunpack.c.l.b16 %v700
        %v1837 = vunpack.c.l.b16 %v701
        %v1838 = vunpack.c.l.b16 %v702
        %v1839 = vunpack.c.l.b16 %v703
        %v1840 = vunpack.c.l.b16 %v704
        %v1841 = vunpack.c.l.b16 %v705
        %v1842 = vunpack.c.l.b16 %v706
        %v1843 = vunpack.c.l.b16 %v707
        %v1844 = vunpack.c.l.b16 %v708
        %v1845 = vunpack.c.l.b16 %v709
        %v1846 = vunpack.c.l.b16 %v710
        %v1847 = vunpack.c.l.b16 %v711
        %v1848 = vunpack.c.l.b16 %v712
        %v1849 = vunpack.c.l.b16 %v713
        %v1850 = vunpack.c.l.b16 %v714
        %v1851 = vunpack.c.l.b16 %v715
        %v1852 = vunpack.c.l.b16 %v716
        %v1853 = vunpack.c.l.b16 %v717
        %v1854 = vunpack.c.l.b16 %v718
        %v1855 = vunpack.c.l.b16 %v719
        %v1856 = vunpack.c.l.b16 %v720
        %v1857 = vunpack.c.l.b16 %v721
        %v1858 = vunpack.c.l.b16 %v722
        %v1859 = vunpack.c.l.b16 %v723
        %v1860 = vunpack.c.l.b16 %v724
        %v1861 = vunpack.c.l.b16 %v725
        %v1862 = vunpack.c.l.b16 %v726
        %v1863 = vunpack.c.l.b16 %v727
        %v1864 = vunpack.c.l.b16 %v728
        %v1865 = vunpack.c.l.b16 %v729
        %v1866 = vunpack.c.l.b16 %v730
        %v1867 = vunpack.c.l.b16 %v731
        %v1868 = vunpack.c.l.b16 %v732
        %v1869 = vunpack.c.l.b16 %v733
        %v1870 = vunpack.c.l.b16 %v734
        %v1871 = vunpack.c.l.b16 %v735
        %v1872 = vunpack.c.l.b16 %v736
        %v1873 = vunpack.c.l.b16 %v737
        %v1874 = vunpack.c.l.b16 %v738
        %v1875 = vunpack.c.l.b16 %v739
        %v1876 = vunpack.c.l.b16 %v740
        %v1877 = vunpack.c.l.b16 %v741
        %v1878 = vunpack.c.l.b16 %v742
        %v1879 = vunpack.c.l.b16 %v743
        %v1880 = vunpack.c.l.b16 %v744
        %v1881 = vunpack.c.l.b16 %v745
        %v1882 = vunpack.c.l.b16 %v746
        %v1883 = vunpack.c.l.b16 %v747
        %v1884 = vunpack.c.l.b16 %v748
        %v1885 = vunpack.c.l.b16 %v749
        %v1886 = vunpack.c.l.b16 %v750
        %v1887 = vunpack.c.l.b16 %v751
        %v1888 = vunpack.c.l.b16 %v752
        %v1889 = vunpack.c.l.b16 %v753
        %v1890 = vunpack.c.l.b16 %v754
        %v1891 = vunpack.c.l.b16 %v755
        %v1892 = vunpack.c.l.b16 %v756
        %v1893 = vunpack.c.l.b16 %v757
        %v1894 = vunpack.c.l.b16 %v758
        %v1895 = vunpack.c.l.b16 %v759
        %v1896 = vunpack.c.l.b16 %v760
        %v1897 = vunpack.c.l.b16 %v761
        %v1898 = vunpack.c.l.b16 %v762
        %v1899 = vunpack.c.l.b16 %v763
        %v1900 = vunpack.c.l.b16 %v764
        %v1901 = vunpack.c.l.b16 %v765
        %v1902 = vunpack.c.l.b16 %v766
        %v1903 = vunpack.c.l.b16 %v767
        %v1904 = vunpack.c.l.b16 %v768
        %v1905 = vunpack.c.l.b16 %v769
        %v1906 = vunpack.c.l.b16 %v770
        %v1907 = vunpack.c.l.b16 %v771
        %v1908 = vunpack.c.l.b16 %v772
        %v1909 = vunpack.c.l.b16 %v773
        %v1910 = vunpack.c.l.b16 %v774
        %v1911 = vunpack.c.l.b16 %v775
        %v1912 = vunpack.c.l.b16 %v776
        %v1913 = vunpack.c.l.b16 %v777
        %v1914 = vunpack.c.l.b16 %v778
        %v1915 = vunpack.c.l.b16 %v779
        %v1916 = vunpack.c.l.b16 %v780
        %v1917 = vunpack.c.l.b16 %v781
        %v1918 = vunpack.c.l.b16 %v782
        %v1919 = vpack.c.b16 %v1408, %v1407
        %v1920 = vpack.c.b16 %v1410, %v1409
        %v1921 = vpack.c.b16 %v1412, %v1411
        %v1922 = vpack.c.b16 %v1414, %v1413
        %v1923 = vpack.c.b16 %v1416, %v1415
        %v1924 = vpack.c.b16 %v1418, %v1417
        %v1925 = vpack.c.b16 %v1420, %v1419
        %v1926 = vpack.c.b16 %v1422, %v1421
        %v1927 = vpack.c.b16 %v1424, %v1423
        %v1928 = vpack.c.b16 %v1426, %v1425
        %v1929 = vpack.c.b16 %v1428, %v1427
        %v1930 = vpack.c.b16 %v1430, %v1429
        %v1931 = vpack.c.b16 %v1432, %v1431
        %v1932 = vpack.c.b16 %v1434, %v1433
        %v1933 = vpack.c.b16 %v1436, %v1435
        %v1934 = vpack.c.b16 %v1438, %v1437
        %v1935 = vpack.c.b16 %v1440, %v1439
        %v1936 = vpack.c.b16 %v1442, %v1441
        %v1937 = vpack.c.b16 %v1444, %v1443
        %v1938 = vpack.c.b16 %v1446, %v1445
        %v1939 = vpack.c.b16 %v1448, %v1447
        %v1940 = vpack.c.b16 %v1450, %v1449
        %v1941 = vpack.c.b16 %v1452, %v1451
        %v1942 = vpack.c.b16 %v1454, %v1453
        %v1943 = vpack.c.b16 %v1456, %v1455
        %v1944 = vpack.c.b16 %v1458, %v1457
        %v1945 = vpack.c.b16 %v1460, %v1459
        %v1946 = vpack.c.b16 %v1462, %v1461
        %v1947 = vpack.c.b16 %v1464, %v1463
        %v1948 = vpack.c.b16 %v1466, %v1465
        %v1949 = vpack.c.b16 %v1468, %v1467
        %v1950 = vpack.c.b16 %v1470, %v1469
        %v1951 = vpack.c.b16 %v1472, %v1471
        %v1952 = vpack.c.b16 %v1474, %v1473
        %v1953 = vpack.c.b16 %v1476, %v1475
        %v1954 = vpack.c.b16 %v1478, %v1477
        %v1955 = vpack.c.b16 %v1480, %v1479
        %v1956 = vpack.c.b16 %v1482, %v1481
        %v1957 = vpack.c.b16 %v1484, %v1483
        %v1958 = vpack.c.b16 %v1486, %v1485
        %v1959 = vpack.c.b16 %v1488, %v1487
        %v1960 = vpack.c.b16 %v1490, %v1489
        %v1961 = vpack.c.b16 %v1492, %v1491
        %v1962 = vpack.c.b16 %v1494, %v1493
        %v1963 = vpack.c.b16 %v1496, %v1495
        %v1964 = vpack.c.b16 %v1498, %v1497
        %v1965 = vpack.c.b16 %v1500, %v1499
        %v1966 = vpack.c.b16 %v1502, %v1501
        %v1967 = vpack.c.b16 %v1504, %v1503
        %v1968 = vpack.c.b16 %v1506, %v1505
        %v1969 = vpack.c.b16 %v1508, %v1507
        %v1970 = vpack.c.b16 %v1510, %v1509
        %v1971 = vpack.c.b16 %v1512, %v1511
        %v1972 = vpack.c.b16 %v1514, %v1513
        %v1973 = vpack.c.b16 %v1516, %v1515
        %v1974 = vpack.c.b16 %v1518, %v1517
        %v1975 = vpack.c.b16 %v1520, %v1519
        %v1976 = vpack.c.b16 %v1522, %v1521
        %v1977 = vpack.c.b16 %v1524, %v1523
        %v1978 = vpack.c.b16 %v1526, %v1525
        %v1979 = vpack.c.b16 %v1528, %v1527
        %v1980 = vpack.c.b16 %v1530, %v1529
        %v1981 = vpack.c.b16 %v1532, %v1531
        %v1982 = vpack.c.b16 %v1534, %v1533
        %v1983 = vpack.c.b16 %v1536, %v1535
        %v1984 = vpack.c.b16 %v1538, %v1537
        %v1985 = vpack.c.b16 %v1540, %v1539
        %v1986 = vpack.c.b16 %v1542, %v1541
        %v1987 = vpack.c.b16 %v1544, %v1543
        %v1988 = vpack.c.b16 %v1546, %v1545
        %v1989 = vpack.c.b16 %v1548, %v1547
        %v1990 = vpack.c.b16 %v1550, %v1549
        %v1991 = vpack.c.b16 %v1552, %v1551
        %v1992 = vpack.c.b16 %v1554, %v1553
        %v1993 = vpack.c.b16 %v1556, %v1555
        %v1994 = vpack.c.b16 %v1558, %v1557
        %v1995 = vpack.c.b16 %v1560, %v1559
        %v1996 = vpack.c.b16 %v1562, %v1561
        %v1997 = vpack.c.b16 %v1564, %v1563
        %v1998 = vpack.c.b16 %v1566, %v1565
        %v1999 = vpack.c.b16 %v1568, %v1567
        %v2000 = vpack.c.b16 %v1570, %v1569
        %v2001 = vpack.c.b16 %v1572, %v1571
        %v2002 = vpack.c.b16 %v1574, %v1573
        %v2003 = vpack.c.b16 %v1576, %v1575
        %v2004 = vpack.c.b16 %v1578, %v1577
        %v2005 = vpack.c.b16 %v1580, %v1579
        %v2006 = vpack.c.b16 %v1582, %v1581
        %v2007 = vpack.c.b16 %v1584, %v1583
        %v2008 = vpack.c.b16 %v1586, %v1585
        %v2009 = vpack.c.b16 %v1588, %v1587
        %v2010 = vpack.c.b16 %v1590, %v1589
        %v2011 = vpack.c.b16 %v1592, %v1591
        %v2012 = vpack.c.b16 %v1594, %v1593
        %v2013 = vpack.c.b16 %v1596, %v1595
        %v2014 = vpack.c.b16 %v1598, %v1597
        %v2015 = vpack.c.b16 %v1600, %v1599
        %v2016 = vpack.c.b16 %v1602, %v1601
        %v2017 = vpack.c.b16 %v1604, %v1603
        %v2018 = vpack.c.b16 %v1606, %v1605
        %v2019 = vpack.c.b16 %v1608, %v1607
        %v2020 = vpack.c.b16 %v1610, %v1609
        %v2021 = vpack.c.b16 %v1612, %v1611
        %v2022 = vpack.c.b16 %v1614, %v1613
        %v2023 = vpack.c.b16 %v1616, %v1615
        %v2024 = vpack.c.b16 %v1618, %v1617
        %v2025 = vpack.c.b16 %v1620, %v1619
        %v2026 = vpack.c.b16 %v1622, %v1621
        %v2027 = vpack.c.b16 %v1624, %v1623
        %v2028 = vpack.c.b16 %v1626, %v1625
        %v2029 = vpack.c.b16 %v1628, %v1627
        %v2030 = vpack.c.b16 %v1630, %v1629
        %v2031 = vpack.c.b16 %v1632, %v1631
        %v2032 = vpack.c.b16 %v1634, %v1633
        %v2033 = vpack.c.b16 %v1636, %v1635
        %v2034 = vpack.c.b16 %v1638, %v1637
        %v2035 = vpack.c.b16 %v1640, %v1639
        %v2036 = vpack.c.b16 %v1642, %v1641
        %v2037 = vpack.c.b16 %v1644, %v1643
        %v2038 = vpack.c.b16 %v1646, %v1645
        %v2039 = vpack.c.b16 %v1648, %v1647
        %v2040 = vpack.c.b16 %v1650, %v1649
        %v2041 = vpack.c.b16 %v1652, %v1651
        %v2042 = vpack.c.b16 %v1654, %v1653
        %v2043 = vpack.c.b16 %v1656, %v1655
        %v2044 = vpack.c.b16 %v1658, %v1657
        %v2045 = vpack.c.b16 %v1660, %v1659
        %v2046 = vpack.c.b16 %v1662, %v1661
        %v2047 = vpack.c.b16 %v1664, %v1663
        %v2048 = vpack.c.b16 %v1666, %v1665
        %v2049 = vpack.c.b16 %v1668, %v1667
        %v2050 = vpack.c.b16 %v1670, %v1669
        %v2051 = vpack.c.b16 %v1672, %v1671
        %v2052 = vpack.c.b16 %v1674, %v1673
        %v2053 = vpack.c.b16 %v1676, %v1675
        %v2054 = vpack.c.b16 %v1678, %v1677
        %v2055 = vpack.c.b16 %v1680, %v1679
        %v2056 = vpack.c.b16 %v1682, %v1681
        %v2057 = vpack.c.b16 %v1684, %v1683
        %v2058 = vpack.c.b16 %v1686, %v1685
        %v2059 = vpack.c.b16 %v1688, %v1687
        %v2060 = vpack.c.b16 %v1690, %v1689
        %v2061 = vpack.c.b16 %v1692, %v1691
        %v2062 = vpack.c.b16 %v1694, %v1693
        %v2063 = vpack.c.b16 %v1696, %v1695
        %v2064 = vpack.c.b16 %v1698, %v1697
        %v2065 = vpack.c.b16 %v1700, %v1699
        %v2066 = vpack.c.b16 %v1702, %v1701
        %v2067 = vpack.c.b16 %v1704, %v1703
        %v2068 = vpack.c.b16 %v1706, %v1705
        %v2069 = vpack.c.b16 %v1708, %v1707
        %v2070 = vpack.c.b16 %v1710, %v1709
        %v2071 = vpack.c.b16 %v1712, %v1711
        %v2072 = vpack.c.b16 %v1714, %v1713
        %v2073 = vpack.c.b16 %v1716, %v1715
        %v2074 = vpack.c.b16 %v1718, %v1717
        %v2075 = vpack.c.b16 %v1720, %v1719
        %v2076 = vpack.c.b16 %v1722, %v1721
        %v2077 = vpack.c.b16 %v1724, %v1723
        %v2078 = vpack.c.b16 %v1726, %v1725
        %v2079 = vpack.c.b16 %v1728, %v1727
        %v2080 = vpack.c.b16 %v1730, %v1729
        %v2081 = vpack.c.b16 %v1732, %v1731
        %v2082 = vpack.c.b16 %v1734, %v1733
        %v2083 = vpack.c.b16 %v1736, %v1735
        %v2084 = vpack.c.b16 %v1738, %v1737
        %v2085 = vpack.c.b16 %v1740, %v1739
        %v2086 = vpack.c.b16 %v1742, %v1741
        %v2087 = vpack.c.b16 %v1744, %v1743
        %v2088 = vpack.c.b16 %v1746, %v1745
        %v2089 = vpack.c.b16 %v1748, %v1747
        %v2090 = vpack.c.b16 %v1750, %v1749
        %v2091 = vpack.c.b16 %v1752, %v1751
        %v2092 = vpack.c.b16 %v1754, %v1753
        %v2093 = vpack.c.b16 %v1756, %v1755
        %v2094 = vpack.c.b16 %v1758, %v1757
        %v2095 = vpack.c.b16 %v1760, %v1759
        %v2096 = vpack.c.b16 %v1762, %v1761
        %v2097 = vpack.c.b16 %v1764, %v1763
        %v2098 = vpack.c.b16 %v1766, %v1765
        %v2099 = vpack.c.b16 %v1768, %v1767
        %v2100 = vpack.c.b16 %v1770, %v1769
        %v2101 = vpack.c.b16 %v1772, %v1771
        %v2102 = vpack.c.b16 %v1774, %v1773
        %v2103 = vpack.c.b16 %v1776, %v1775
        %v2104 = vpack.c.b16 %v1778, %v1777
        %v2105 = vpack.c.b16 %v1780, %v1779
        %v2106 = vpack.c.b16 %v1782, %v1781
        %v2107 = vpack.c.b16 %v1784, %v1783
        %v2108 = vpack.c.b16 %v1786, %v1785
        %v2109 = vpack.c.b16 %v1788, %v1787
        %v2110 = vpack.c.b16 %v1790, %v1789
        %v2111 = vpack.c.b16 %v1792, %v1791
        %v2112 = vpack.c.b16 %v1794, %v1793
        %v2113 = vpack.c.b16 %v1796, %v1795
        %v2114 = vpack.c.b16 %v1798, %v1797
        %v2115 = vpack.c.b16 %v1800, %v1799
        %v2116 = vpack.c.b16 %v1802, %v1801
        %v2117 = vpack.c.b16 %v1804, %v1803
        %v2118 = vpack.c.b16 %v1806, %v1805
        %v2119 = vpack.c.b16 %v1808, %v1807
        %v2120 = vpack.c.b16 %v1810, %v1809
        %v2121 = vpack.c.b16 %v1812, %v1811
        %v2122 = vpack.c.b16 %v1814, %v1813
        %v2123 = vpack.c.b16 %v1816, %v1815
        %v2124 = vpack.c.b16 %v1818, %v1817
        %v2125 = vpack.c.b16 %v1820, %v1819
        %v2126 = vpack.c.b16 %v1822, %v1821
        %v2127 = vpack.c.b16 %v1824, %v1823
        %v2128 = vpack.c.b16 %v1826, %v1825
        %v2129 = vpack.c.b16 %v1828, %v1827
        %v2130 = vpack.c.b16 %v1830, %v1829
        %v2131 = vpack.c.b16 %v1832, %v1831
        %v2132 = vpack.c.b16 %v1834, %v1833
        %v2133 = vpack.c.b16 %v1836, %v1835
        %v2134 = vpack.c.b16 %v1838, %v1837
        %v2135 = vpack.c.b16 %v1840, %v1839
        %v2136 = vpack.c.b16 %v1842, %v1841
        %v2137 = vpack.c.b16 %v1844, %v1843
        %v2138 = vpack.c.b16 %v1846, %v1845
        %v2139 = vpack.c.b16 %v1848, %v1847
        %v2140 = vpack.c.b16 %v1850, %v1849
        %v2141 = vpack.c.b16 %v1852, %v1851
        %v2142 = vpack.c.b16 %v1854, %v1853
        %v2143 = vpack.c.b16 %v1856, %v1855
        %v2144 = vpack.c.b16 %v1858, %v1857
        %v2145 = vpack.c.b16 %v1860, %v1859
        %v2146 = vpack.c.b16 %v1862, %v1861
        %v2147 = vpack.c.b16 %v1864, %v1863
        %v2148 = vpack.c.b16 %v1866, %v1865
        %v2149 = vpack.c.b16 %v1868, %v1867
        %v2150 = vpack.c.b16 %v1870, %v1869
        %v2151 = vpack.c.b16 %v1872, %v1871
        %v2152 = vpack.c.b16 %v1874, %v1873
        %v2153 = vpack.c.b16 %v1876, %v1875
        %v2154 = vpack.c.b16 %v1878, %v1877
        %v2155 = vpack.c.b16 %v1880, %v1879
        %v2156 = vpack.c.b16 %v1882, %v1881
        %v2157 = vpack.c.b16 %v1884, %v1883
        %v2158 = vpack.c.b16 %v1886, %v1885
        %v2159 = vpack.c.b16 %v1888, %v1887
        %v2160 = vpack.c.b16 %v1890, %v1889
        %v2161 = vpack.c.b16 %v1892, %v1891
        %v2162 = vpack.c.b16 %v1894, %v1893
        %v2163 = vpack.c.b16 %v1896, %v1895
        %v2164 = vpack.c.b16 %v1898, %v1897
        %v2165 = vpack.c.b16 %v1900, %v1899
        %v2166 = vpack.c.b16 %v1902, %v1901
        %v2167 = vpack.c.b16 %v1904, %v1903
        %v2168 = vpack.c.b16 %v1906, %v1905
        %v2169 = vpack.c.b16 %v1908, %v1907
        %v2170 = vpack.c.b16 %v1910, %v1909
        %v2171 = vpack.c.b16 %v1912, %v1911
        %v2172 = vpack.c.b16 %v1914, %v1913
        %v2173 = vpack.c.b16 %v1916, %v1915
        %v2174 = vpack.c.b16 %v1918, %v1917
        %2431 = vmatprep.subr.bf16.mxu0 0
        %2432 = vmatpush1.bf16.msra.mxu0 %v1919
        %2433 = vmatprep.subr.bf16.mxu0 0
        %2434 = vmatpush1.bf16.msra.mxu0 %v1920
        %2435 = vmatprep.subr.bf16.mxu0 0
        %2436 = vmatpush1.bf16.msra.mxu0 %v1921
        %2437 = vmatprep.subr.bf16.mxu0 0
        %2438 = vmatpush1.bf16.msra.mxu0 %v1922
        %2439 = vmatprep.subr.bf16.mxu0 0
        %2440 = vmatpush1.bf16.msra.mxu0 %v1923
        %2441 = vmatprep.subr.bf16.mxu0 0
        %2442 = vmatpush1.bf16.msra.mxu0 %v1924
        %2443 = vmatprep.subr.bf16.mxu0 0
        %2444 = vmatpush1.bf16.msra.mxu0 %v1925
        %2445 = vmatprep.subr.bf16.mxu0 0
        %2446 = vmatpush1.bf16.msra.mxu0 %v1926
        %2447 = vmatprep.subr.bf16.mxu0 0
        %2448 = vmatpush1.bf16.msra.mxu0 %v1927
        %2449 = vmatprep.subr.bf16.mxu0 0
        %2450 = vmatpush1.bf16.msra.mxu0 %v1928
        %2451 = vmatprep.subr.bf16.mxu0 0
        %2452 = vmatpush1.bf16.msra.mxu0 %v1929
        %2453 = vmatprep.subr.bf16.mxu0 0
        %2454 = vmatpush1.bf16.msra.mxu0 %v1930
        %2455 = vmatprep.subr.bf16.mxu0 0
        %2456 = vmatpush1.bf16.msra.mxu0 %v1931
        %2457 = vmatprep.subr.bf16.mxu0 0
        %2458 = vmatpush1.bf16.msra.mxu0 %v1932
        %2459 = vmatprep.subr.bf16.mxu0 0
        %2460 = vmatpush1.bf16.msra.mxu0 %v1933
        %2461 = vmatprep.subr.bf16.mxu0 0
        %2462 = vmatpush1.bf16.msra.mxu0 %v1934
        %2463 = vmatprep.mubr.bf16.mxu0 %v832
        %2464 = vmatmul.mubr.bf16.gmra.mrb[0].mxu0 %v831
        %v2465 = vpop.f32.mrb[0].mxu0
        %v2466 = vadd.f32 0.0, %v2465
        %v2467 = vpop.f32.mrb[0].mxu0
        %v2468 = vpop.f32.mrb[0].mxu0
        %v2469 = vpop.f32.mrb[0].mxu0
        %2470 = vdwg.mxu0
        %2471 = vmatprep.subr.bf16.mxu0 0
        %2472 = vmatpush1.bf16.msra.mxu0 %v1935
        %2473 = vmatprep.subr.bf16.mxu0 0
        %2474 = vmatpush1.bf16.msra.mxu0 %v1936
        %2475 = vmatprep.subr.bf16.mxu0 0
        %2476 = vmatpush1.bf16.msra.mxu0 %v1937
        %2477 = vmatprep.subr.bf16.mxu0 0
        %2478 = vmatpush1.bf16.msra.mxu0 %v1938
        %2479 = vmatprep.subr.bf16.mxu0 0
        %2480 = vmatpush1.bf16.msra.mxu0 %v1939
        %2481 = vmatprep.subr.bf16.mxu0 0
        %2482 = vmatpush1.bf16.msra.mxu0 %v1940
        %2483 = vmatprep.subr.bf16.mxu0 0
        %2484 = vmatpush1.bf16.msra.mxu0 %v1941
        %2485 = vmatprep.subr.bf16.mxu0 0
        %2486 = vmatpush1.bf16.msra.mxu0 %v1942
        %2487 = vmatprep.subr.bf16.mxu0 0
        %2488 = vmatpush1.bf16.msra.mxu0 %v1943
        %2489 = vmatprep.subr.bf16.mxu0 0
        %2490 = vmatpush1.bf16.msra.mxu0 %v1944
        %2491 = vmatprep.subr.bf16.mxu0 0
        %2492 = vmatpush1.bf16.msra.mxu0 %v1945
        %2493 = vmatprep.subr.bf16.mxu0 0
        %2494 = vmatpush1.bf16.msra.mxu0 %v1946
        %2495 = vmatprep.subr.bf16.mxu0 0
        %2496 = vmatpush1.bf16.msra.mxu0 %v1947
        %2497 = vmatprep.subr.bf16.mxu0 0
        %2498 = vmatpush1.bf16.msra.mxu0 %v1948
        %2499 = vmatprep.subr.bf16.mxu0 0
        %2500 = vmatpush1.bf16.msra.mxu0 %v1949
        %2501 = vmatprep.subr.bf16.mxu0 0
        %2502 = vmatpush1.bf16.msra.mxu0 %v1950
        %2503 = vmatprep.mubr.bf16.mxu0 %v834
        %2504 = vmatmul.mubr.bf16.gmra.mrb[0].mxu0 %v833
        %v2505 = vpop.f32.mrb[0].mxu0
        %v2506 = vadd.f32 %v2466, %v2505
        %v2507 = vpop.f32.mrb[0].mxu0
        %v2508 = vpop.f32.mrb[0].mxu0
        %v2509 = vpop.f32.mrb[0].mxu0
        %2510 = vdwg.mxu0
        %2511 = vmatprep.subr.bf16.mxu0 0
        %2512 = vmatpush1.bf16.msra.mxu0 %v1951
        %2513 = vmatprep.subr.bf16.mxu0 0
        %2514 = vmatpush1.bf16.msra.mxu0 %v1952
        %2515 = vmatprep.subr.bf16.mxu0 0
        %2516 = vmatpush1.bf16.msra.mxu0 %v1953
        %2517 = vmatprep.subr.bf16.mxu0 0
        %2518 = vmatpush1.bf16.msra.mxu0 %v1954
        %2519 = vmatprep.subr.bf16.mxu0 0
        %2520 = vmatpush1.bf16.msra.mxu0 %v1955
        %2521 = vmatprep.subr.bf16.mxu0 0
        %2522 = vmatpush1.bf16.msra.mxu0 %v1956
        %2523 = vmatprep.subr.bf16.mxu0 0
        %2524 = vmatpush1.bf16.msra.mxu0 %v1957
        %2525 = vmatprep.subr.bf16.mxu0 0
        %2526 = vmatpush1.bf16.msra.mxu0 %v1958
        %2527 = vmatprep.subr.bf16.mxu0 0
        %2528 = vmatpush1.bf16.msra.mxu0 %v1959
        %2529 = vmatprep.subr.bf16.mxu0 0
        %2530 = vmatpush1.bf16.msra.mxu0 %v1960
        %2531 = vmatprep.subr.bf16.mxu0 0
        %2532 = vmatpush1.bf16.msra.mxu0 %v1961
        %2533 = vmatprep.subr.bf16.mxu0 0
        %2534 = vmatpush1.bf16.msra.mxu0 %v1962
        %2535 = vmatprep.subr.bf16.mxu0 0
        %2536 = vmatpush1.bf16.msra.mxu0 %v1963
        %2537 = vmatprep.subr.bf16.mxu0 0
        %2538 = vmatpush1.bf16.msra.mxu0 %v1964
        %2539 = vmatprep.subr.bf16.mxu0 0
        %2540 = vmatpush1.bf16.msra.mxu0 %v1965
        %2541 = vmatprep.subr.bf16.mxu0 0
        %2542 = vmatpush1.bf16.msra.mxu0 %v1966
        %2543 = vmatprep.mubr.bf16.mxu0 %v836
        %2544 = vmatmul.mubr.bf16.gmra.mrb[0].mxu0 %v835
        %v2545 = vpop.f32.mrb[0].mxu0
        %v2546 = vadd.f32 %v2506, %v2545
        %v2547 = vpop.f32.mrb[0].mxu0
        %v2548 = vpop.f32.mrb[0].mxu0
        %v2549 = vpop.f32.mrb[0].mxu0
        %2550 = vdwg.mxu0
        %2551 = vmatprep.subr.bf16.mxu0 0
        %2552 = vmatpush1.bf16.msra.mxu0 %v1967
        %2553 = vmatprep.subr.bf16.mxu0 0
        %2554 = vmatpush1.bf16.msra.mxu0 %v1968
        %2555 = vmatprep.subr.bf16.mxu0 0
        %2556 = vmatpush1.bf16.msra.mxu0 %v1969
        %2557 = vmatprep.subr.bf16.mxu0 0
        %2558 = vmatpush1.bf16.msra.mxu0 %v1970
        %2559 = vmatprep.subr.bf16.mxu0 0
        %2560 = vmatpush1.bf16.msra.mxu0 %v1971
        %2561 = vmatprep.subr.bf16.mxu0 0
        %2562 = vmatpush1.bf16.msra.mxu0 %v1972
        %2563 = vmatprep.subr.bf16.mxu0 0
        %2564 = vmatpush1.bf16.msra.mxu0 %v1973
        %2565 = vmatprep.subr.bf16.mxu0 0
        %2566 = vmatpush1.bf16.msra.mxu0 %v1974
        %2567 = vmatprep.subr.bf16.mxu0 0
        %2568 = vmatpush1.bf16.msra.mxu0 %v1975
        %2569 = vmatprep.subr.bf16.mxu0 0
        %2570 = vmatpush1.bf16.msra.mxu0 %v1976
        %2571 = vmatprep.subr.bf16.mxu0 0
        %2572 = vmatpush1.bf16.msra.mxu0 %v1977
        %2573 = vmatprep.subr.bf16.mxu0 0
        %2574 = vmatpush1.bf16.msra.mxu0 %v1978
        %2575 = vmatprep.subr.bf16.mxu0 0
        %2576 = vmatpush1.bf16.msra.mxu0 %v1979
        %2577 = vmatprep.subr.bf16.mxu0 0
        %2578 = vmatpush1.bf16.msra.mxu0 %v1980
        %2579 = vmatprep.subr.bf16.mxu0 0
        %2580 = vmatpush1.bf16.msra.mxu0 %v1981
        %2581 = vmatprep.subr.bf16.mxu0 0
        %2582 = vmatpush1.bf16.msra.mxu0 %v1982
        %2583 = vmatprep.mubr.bf16.mxu0 %v838
        %2584 = vmatmul.mubr.bf16.gmra.mrb[0].mxu0 %v837
        %v2585 = vpop.f32.mrb[0].mxu0
        %v2586 = vadd.f32 %v2546, %v2585
        %v2587 = vpop.f32.mrb[0].mxu0
        %v2588 = vpop.f32.mrb[0].mxu0
        %v2589 = vpop.f32.mrb[0].mxu0
        %2590 = vdwg.mxu0
        %2591 = vmatprep.subr.bf16.mxu0 0
        %2592 = vmatpush1.bf16.msra.mxu0 %v1983
        %2593 = vmatprep.subr.bf16.mxu0 0
        %2594 = vmatpush1.bf16.msra.mxu0 %v1984
        %2595 = vmatprep.subr.bf16.mxu0 0
        %2596 = vmatpush1.bf16.msra.mxu0 %v1985
        %2597 = vmatprep.subr.bf16.mxu0 0
        %2598 = vmatpush1.bf16.msra.mxu0 %v1986
        %2599 = vmatprep.subr.bf16.mxu0 0
        %2600 = vmatpush1.bf16.msra.mxu0 %v1987
        %2601 = vmatprep.subr.bf16.mxu0 0
        %2602 = vmatpush1.bf16.msra.mxu0 %v1988
        %2603 = vmatprep.subr.bf16.mxu0 0
        %2604 = vmatpush1.bf16.msra.mxu0 %v1989
        %2605 = vmatprep.subr.bf16.mxu0 0
        %2606 = vmatpush1.bf16.msra.mxu0 %v1990
        %2607 = vmatprep.subr.bf16.mxu0 0
        %2608 = vmatpush1.bf16.msra.mxu0 %v1991
        %2609 = vmatprep.subr.bf16.mxu0 0
        %2610 = vmatpush1.bf16.msra.mxu0 %v1992
        %2611 = vmatprep.subr.bf16.mxu0 0
        %2612 = vmatpush1.bf16.msra.mxu0 %v1993
        %2613 = vmatprep.subr.bf16.mxu0 0
        %2614 = vmatpush1.bf16.msra.mxu0 %v1994
        %2615 = vmatprep.subr.bf16.mxu0 0
        %2616 = vmatpush1.bf16.msra.mxu0 %v1995
        %2617 = vmatprep.subr.bf16.mxu0 0
        %2618 = vmatpush1.bf16.msra.mxu0 %v1996
        %2619 = vmatprep.subr.bf16.mxu0 0
        %2620 = vmatpush1.bf16.msra.mxu0 %v1997
        %2621 = vmatprep.subr.bf16.mxu0 0
        %2622 = vmatpush1.bf16.msra.mxu0 %v1998
        %2623 = vmatprep.mubr.bf16.mxu0 %v840
        %2624 = vmatmul.mubr.bf16.gmra.mrb[0].mxu0 %v839
        %v2625 = vpop.f32.mrb[0].mxu0
        %v2626 = vadd.f32 %v2586, %v2625
        %v2627 = vpop.f32.mrb[0].mxu0
        %v2628 = vpop.f32.mrb[0].mxu0
        %v2629 = vpop.f32.mrb[0].mxu0
        %2630 = vdwg.mxu0
        %2631 = vmatprep.subr.bf16.mxu0 0
        %2632 = vmatpush1.bf16.msra.mxu0 %v1999
        %2633 = vmatprep.subr.bf16.mxu0 0
        %2634 = vmatpush1.bf16.msra.mxu0 %v2000
        %2635 = vmatprep.subr.bf16.mxu0 0
        %2636 = vmatpush1.bf16.msra.mxu0 %v2001
        %2637 = vmatprep.subr.bf16.mxu0 0
        %2638 = vmatpush1.bf16.msra.mxu0 %v2002
        %2639 = vmatprep.subr.bf16.mxu0 0
        %2640 = vmatpush1.bf16.msra.mxu0 %v2003
        %2641 = vmatprep.subr.bf16.mxu0 0
        %2642 = vmatpush1.bf16.msra.mxu0 %v2004
        %2643 = vmatprep.subr.bf16.mxu0 0
        %2644 = vmatpush1.bf16.msra.mxu0 %v2005
        %2645 = vmatprep.subr.bf16.mxu0 0
        %2646 = vmatpush1.bf16.msra.mxu0 %v2006
        %2647 = vmatprep.subr.bf16.mxu0 0
        %2648 = vmatpush1.bf16.msra.mxu0 %v2007
        %2649 = vmatprep.subr.bf16.mxu0 0
        %2650 = vmatpush1.bf16.msra.mxu0 %v2008
        %2651 = vmatprep.subr.bf16.mxu0 0
        %2652 = vmatpush1.bf16.msra.mxu0 %v2009
        %2653 = vmatprep.subr.bf16.mxu0 0
        %2654 = vmatpush1.bf16.msra.mxu0 %v2010
        %2655 = vmatprep.subr.bf16.mxu0 0
        %2656 = vmatpush1.bf16.msra.mxu0 %v2011
        %2657 = vmatprep.subr.bf16.mxu0 0
        %2658 = vmatpush1.bf16.msra.mxu0 %v2012
        %2659 = vmatprep.subr.bf16.mxu0 0
        %2660 = vmatpush1.bf16.msra.mxu0 %v2013
        %2661 = vmatprep.subr.bf16.mxu0 0
        %2662 = vmatpush1.bf16.msra.mxu0 %v2014
        %2663 = vmatprep.mubr.bf16.mxu0 %v842
        %2664 = vmatmul.mubr.bf16.gmra.mrb[0].mxu0 %v841
        %v2665 = vpop.f32.mrb[0].mxu0
        %v2666 = vadd.f32 %v2626, %v2665
        %v2667 = vpop.f32.mrb[0].mxu0
        %v2668 = vpop.f32.mrb[0].mxu0
        %v2669 = vpop.f32.mrb[0].mxu0
        %2670 = vdwg.mxu0
        %2671 = vmatprep.subr.bf16.mxu0 0
        %2672 = vmatpush1.bf16.msra.mxu0 %v2015
        %2673 = vmatprep.subr.bf16.mxu0 0
        %2674 = vmatpush1.bf16.msra.mxu0 %v2016
        %2675 = vmatprep.subr.bf16.mxu0 0
        %2676 = vmatpush1.bf16.msra.mxu0 %v2017
        %2677 = vmatprep.subr.bf16.mxu0 0
        %2678 = vmatpush1.bf16.msra.mxu0 %v2018
        %2679 = vmatprep.subr.bf16.mxu0 0
        %2680 = vmatpush1.bf16.msra.mxu0 %v2019
        %2681 = vmatprep.subr.bf16.mxu0 0
        %2682 = vmatpush1.bf16.msra.mxu0 %v2020
        %2683 = vmatprep.subr.bf16.mxu0 0
        %2684 = vmatpush1.bf16.msra.mxu0 %v2021
        %2685 = vmatprep.subr.bf16.mxu0 0
        %2686 = vmatpush1.bf16.msra.mxu0 %v2022
        %2687 = vmatprep.subr.bf16.mxu0 0
        %2688 = vmatpush1.bf16.msra.mxu0 %v2023
        %2689 = vmatprep.subr.bf16.mxu0 0
        %2690 = vmatpush1.bf16.msra.mxu0 %v2024
        %2691 = vmatprep.subr.bf16.mxu0 0
        %2692 = vmatpush1.bf16.msra.mxu0 %v2025
        %2693 = vmatprep.subr.bf16.mxu0 0
        %2694 = vmatpush1.bf16.msra.mxu0 %v2026
        %2695 = vmatprep.subr.bf16.mxu0 0
        %2696 = vmatpush1.bf16.msra.mxu0 %v2027
        %2697 = vmatprep.subr.bf16.mxu0 0
        %2698 = vmatpush1.bf16.msra.mxu0 %v2028
        %2699 = vmatprep.subr.bf16.mxu0 0
        %2700 = vmatpush1.bf16.msra.mxu0 %v2029
        %2701 = vmatprep.subr.bf16.mxu0 0
        %2702 = vmatpush1.bf16.msra.mxu0 %v2030
        %2703 = vmatprep.mubr.bf16.mxu0 %v844
        %2704 = vmatmul.mubr.bf16.gmra.mrb[0].mxu0 %v843
        %v2705 = vpop.f32.mrb[0].mxu0
        %v2706 = vadd.f32 %v2666, %v2705
        %v2707 = vpop.f32.mrb[0].mxu0
        %v2708 = vpop.f32.mrb[0].mxu0
        %v2709 = vpop.f32.mrb[0].mxu0
        %2710 = vdwg.mxu0
        %2711 = vmatprep.subr.bf16.mxu0 0
        %2712 = vmatpush1.bf16.msra.mxu0 %v2031
        %2713 = vmatprep.subr.bf16.mxu0 0
        %2714 = vmatpush1.bf16.msra.mxu0 %v2032
        %2715 = vmatprep.subr.bf16.mxu0 0
        %2716 = vmatpush1.bf16.msra.mxu0 %v2033
        %2717 = vmatprep.subr.bf16.mxu0 0
        %2718 = vmatpush1.bf16.msra.mxu0 %v2034
        %2719 = vmatprep.subr.bf16.mxu0 0
        %2720 = vmatpush1.bf16.msra.mxu0 %v2035
        %2721 = vmatprep.subr.bf16.mxu0 0
        %2722 = vmatpush1.bf16.msra.mxu0 %v2036
        %2723 = vmatprep.subr.bf16.mxu0 0
        %2724 = vmatpush1.bf16.msra.mxu0 %v2037
        %2725 = vmatprep.subr.bf16.mxu0 0
        %2726 = vmatpush1.bf16.msra.mxu0 %v2038
        %2727 = vmatprep.subr.bf16.mxu0 0
        %2728 = vmatpush1.bf16.msra.mxu0 %v2039
        %2729 = vmatprep.subr.bf16.mxu0 0
        %2730 = vmatpush1.bf16.msra.mxu0 %v2040
        %2731 = vmatprep.subr.bf16.mxu0 0
        %2732 = vmatpush1.bf16.msra.mxu0 %v2041
        %2733 = vmatprep.subr.bf16.mxu0 0
        %2734 = vmatpush1.bf16.msra.mxu0 %v2042
        %2735 = vmatprep.subr.bf16.mxu0 0
        %2736 = vmatpush1.bf16.msra.mxu0 %v2043
        %2737 = vmatprep.subr.bf16.mxu0 0
        %2738 = vmatpush1.bf16.msra.mxu0 %v2044
        %2739 = vmatprep.subr.bf16.mxu0 0
        %2740 = vmatpush1.bf16.msra.mxu0 %v2045
        %2741 = vmatprep.subr.bf16.mxu0 0
        %2742 = vmatpush1.bf16.msra.mxu0 %v2046
        %2743 = vmatprep.mubr.bf16.mxu0 %v846
        %2744 = vmatmul.mubr.bf16.gmra.mrb[0].mxu0 %v845
        %v2745 = vpop.f32.mrb[0].mxu0
        %v2746 = vadd.f32 %v2706, %v2745
        %v2747 = vpop.f32.mrb[0].mxu0
        %v2748 = vpop.f32.mrb[0].mxu0
        %v2749 = vpop.f32.mrb[0].mxu0
        %2750 = vdwg.mxu0
        %2751 = vmatprep.subr.bf16.mxu0 0
        %2752 = vmatpush1.bf16.msra.mxu0 %v2047
        %2753 = vmatprep.subr.bf16.mxu0 0
        %2754 = vmatpush1.bf16.msra.mxu0 %v2048
        %2755 = vmatprep.subr.bf16.mxu0 0
        %2756 = vmatpush1.bf16.msra.mxu0 %v2049
        %2757 = vmatprep.subr.bf16.mxu0 0
        %2758 = vmatpush1.bf16.msra.mxu0 %v2050
        %2759 = vmatprep.subr.bf16.mxu0 0
        %2760 = vmatpush1.bf16.msra.mxu0 %v2051
        %2761 = vmatprep.subr.bf16.mxu0 0
        %2762 = vmatpush1.bf16.msra.mxu0 %v2052
        %2763 = vmatprep.subr.bf16.mxu0 0
        %2764 = vmatpush1.bf16.msra.mxu0 %v2053
        %2765 = vmatprep.subr.bf16.mxu0 0
        %2766 = vmatpush1.bf16.msra.mxu0 %v2054
        %2767 = vmatprep.subr.bf16.mxu0 0
        %2768 = vmatpush1.bf16.msra.mxu0 %v2055
        %2769 = vmatprep.subr.bf16.mxu0 0
        %2770 = vmatpush1.bf16.msra.mxu0 %v2056
        %2771 = vmatprep.subr.bf16.mxu0 0
        %2772 = vmatpush1.bf16.msra.mxu0 %v2057
        %2773 = vmatprep.subr.bf16.mxu0 0
        %2774 = vmatpush1.bf16.msra.mxu0 %v2058
        %2775 = vmatprep.subr.bf16.mxu0 0
        %2776 = vmatpush1.bf16.msra.mxu0 %v2059
        %2777 = vmatprep.subr.bf16.mxu0 0
        %2778 = vmatpush1.bf16.msra.mxu0 %v2060
        %2779 = vmatprep.subr.bf16.mxu0 0
        %2780 = vmatpush1.bf16.msra.mxu0 %v2061
        %2781 = vmatprep.subr.bf16.mxu0 0
        %2782 = vmatpush1.bf16.msra.mxu0 %v2062
        %2783 = vmatprep.mubr.bf16.mxu0 %v848
        %2784 = vmatmul.mubr.bf16.gmra.mrb[0].mxu0 %v847
        %v2785 = vpop.f32.mrb[0].mxu0
        %v2786 = vadd.f32 %v2746, %v2785
        %v2787 = vpop.f32.mrb[0].mxu0
        %v2788 = vpop.f32.mrb[0].mxu0
        %v2789 = vpop.f32.mrb[0].mxu0
        %2790 = vdwg.mxu0
        %2791 = vmatprep.subr.bf16.mxu0 0
        %2792 = vmatpush1.bf16.msra.mxu0 %v2063
        %2793 = vmatprep.subr.bf16.mxu0 0
        %2794 = vmatpush1.bf16.msra.mxu0 %v2064
        %2795 = vmatprep.subr.bf16.mxu0 0
        %2796 = vmatpush1.bf16.msra.mxu0 %v2065
        %2797 = vmatprep.subr.bf16.mxu0 0
        %2798 = vmatpush1.bf16.msra.mxu0 %v2066
        %2799 = vmatprep.subr.bf16.mxu0 0
        %2800 = vmatpush1.bf16.msra.mxu0 %v2067
        %2801 = vmatprep.subr.bf16.mxu0 0
        %2802 = vmatpush1.bf16.msra.mxu0 %v2068
        %2803 = vmatprep.subr.bf16.mxu0 0
        %2804 = vmatpush1.bf16.msra.mxu0 %v2069
        %2805 = vmatprep.subr.bf16.mxu0 0
        %2806 = vmatpush1.bf16.msra.mxu0 %v2070
        %2807 = vmatprep.subr.bf16.mxu0 0
        %2808 = vmatpush1.bf16.msra.mxu0 %v2071
        %2809 = vmatprep.subr.bf16.mxu0 0
        %2810 = vmatpush1.bf16.msra.mxu0 %v2072
        %2811 = vmatprep.subr.bf16.mxu0 0
        %2812 = vmatpush1.bf16.msra.mxu0 %v2073
        %2813 = vmatprep.subr.bf16.mxu0 0
        %2814 = vmatpush1.bf16.msra.mxu0 %v2074
        %2815 = vmatprep.subr.bf16.mxu0 0
        %2816 = vmatpush1.bf16.msra.mxu0 %v2075
        %2817 = vmatprep.subr.bf16.mxu0 0
        %2818 = vmatpush1.bf16.msra.mxu0 %v2076
        %2819 = vmatprep.subr.bf16.mxu0 0
        %2820 = vmatpush1.bf16.msra.mxu0 %v2077
        %2821 = vmatprep.subr.bf16.mxu0 0
        %2822 = vmatpush1.bf16.msra.mxu0 %v2078
        %2823 = vmatprep.mubr.bf16.mxu0 %v850
        %2824 = vmatmul.mubr.bf16.gmra.mrb[0].mxu0 %v849
        %v2825 = vpop.f32.mrb[0].mxu0
        %v2826 = vadd.f32 %v2786, %v2825
        %v2827 = vpop.f32.mrb[0].mxu0
        %v2828 = vpop.f32.mrb[0].mxu0
        %v2829 = vpop.f32.mrb[0].mxu0
        %2830 = vdwg.mxu0
        %2831 = vmatprep.subr.bf16.mxu0 0
        %2832 = vmatpush1.bf16.msra.mxu0 %v2079
        %2833 = vmatprep.subr.bf16.mxu0 0
        %2834 = vmatpush1.bf16.msra.mxu0 %v2080
        %2835 = vmatprep.subr.bf16.mxu0 0
        %2836 = vmatpush1.bf16.msra.mxu0 %v2081
        %2837 = vmatprep.subr.bf16.mxu0 0
        %2838 = vmatpush1.bf16.msra.mxu0 %v2082
        %2839 = vmatprep.subr.bf16.mxu0 0
        %2840 = vmatpush1.bf16.msra.mxu0 %v2083
        %2841 = vmatprep.subr.bf16.mxu0 0
        %2842 = vmatpush1.bf16.msra.mxu0 %v2084
        %2843 = vmatprep.subr.bf16.mxu0 0
        %2844 = vmatpush1.bf16.msra.mxu0 %v2085
        %2845 = vmatprep.subr.bf16.mxu0 0
        %2846 = vmatpush1.bf16.msra.mxu0 %v2086
        %2847 = vmatprep.subr.bf16.mxu0 0
        %2848 = vmatpush1.bf16.msra.mxu0 %v2087
        %2849 = vmatprep.subr.bf16.mxu0 0
        %2850 = vmatpush1.bf16.msra.mxu0 %v2088
        %2851 = vmatprep.subr.bf16.mxu0 0
        %2852 = vmatpush1.bf16.msra.mxu0 %v2089
        %2853 = vmatprep.subr.bf16.mxu0 0
        %2854 = vmatpush1.bf16.msra.mxu0 %v2090
        %2855 = vmatprep.subr.bf16.mxu0 0
        %2856 = vmatpush1.bf16.msra.mxu0 %v2091
        %2857 = vmatprep.subr.bf16.mxu0 0
        %2858 = vmatpush1.bf16.msra.mxu0 %v2092
        %2859 = vmatprep.subr.bf16.mxu0 0
        %2860 = vmatpush1.bf16.msra.mxu0 %v2093
        %2861 = vmatprep.subr.bf16.mxu0 0
        %2862 = vmatpush1.bf16.msra.mxu0 %v2094
        %2863 = vmatprep.mubr.bf16.mxu0 %v852
        %2864 = vmatmul.mubr.bf16.gmra.mrb[0].mxu0 %v851
        %v2865 = vpop.f32.mrb[0].mxu0
        %v2866 = vadd.f32 %v2826, %v2865
        %v2867 = vpop.f32.mrb[0].mxu0
        %v2868 = vpop.f32.mrb[0].mxu0
        %v2869 = vpop.f32.mrb[0].mxu0
        %2870 = vdwg.mxu0
        %2871 = vmatprep.subr.bf16.mxu0 0
        %2872 = vmatpush1.bf16.msra.mxu0 %v2095
        %2873 = vmatprep.subr.bf16.mxu0 0
        %2874 = vmatpush1.bf16.msra.mxu0 %v2096
        %2875 = vmatprep.subr.bf16.mxu0 0
        %2876 = vmatpush1.bf16.msra.mxu0 %v2097
        %2877 = vmatprep.subr.bf16.mxu0 0
        %2878 = vmatpush1.bf16.msra.mxu0 %v2098
        %2879 = vmatprep.subr.bf16.mxu0 0
        %2880 = vmatpush1.bf16.msra.mxu0 %v2099
        %2881 = vmatprep.subr.bf16.mxu0 0
        %2882 = vmatpush1.bf16.msra.mxu0 %v2100
        %2883 = vmatprep.subr.bf16.mxu0 0
        %2884 = vmatpush1.bf16.msra.mxu0 %v2101
        %2885 = vmatprep.subr.bf16.mxu0 0
        %2886 = vmatpush1.bf16.msra.mxu0 %v2102
        %2887 = vmatprep.subr.bf16.mxu0 0
        %2888 = vmatpush1.bf16.msra.mxu0 %v2103
        %2889 = vmatprep.subr.bf16.mxu0 0
        %2890 = vmatpush1.bf16.msra.mxu0 %v2104
        %2891 = vmatprep.subr.bf16.mxu0 0
        %2892 = vmatpush1.bf16.msra.mxu0 %v2105
        %2893 = vmatprep.subr.bf16.mxu0 0
        %2894 = vmatpush1.bf16.msra.mxu0 %v2106
        %2895 = vmatprep.subr.bf16.mxu0 0
        %2896 = vmatpush1.bf16.msra.mxu0 %v2107
        %2897 = vmatprep.subr.bf16.mxu0 0
        %2898 = vmatpush1.bf16.msra.mxu0 %v2108
        %2899 = vmatprep.subr.bf16.mxu0 0
        %2900 = vmatpush1.bf16.msra.mxu0 %v2109
        %2901 = vmatprep.subr.bf16.mxu0 0
        %2902 = vmatpush1.bf16.msra.mxu0 %v2110
        %2903 = vmatprep.mubr.bf16.mxu0 %v854
        %2904 = vmatmul.mubr.bf16.gmra.mrb[0].mxu0 %v853
        %v2905 = vpop.f32.mrb[0].mxu0
        %v2906 = vadd.f32 %v2866, %v2905
        %v2907 = vpop.f32.mrb[0].mxu0
        %v2908 = vpop.f32.mrb[0].mxu0
        %v2909 = vpop.f32.mrb[0].mxu0
        %2910 = vdwg.mxu0
        %2911 = vmatprep.subr.bf16.mxu0 0
        %2912 = vmatpush1.bf16.msra.mxu0 %v2111
        %2913 = vmatprep.subr.bf16.mxu0 0
        %2914 = vmatpush1.bf16.msra.mxu0 %v2112
        %2915 = vmatprep.subr.bf16.mxu0 0
        %2916 = vmatpush1.bf16.msra.mxu0 %v2113
        %2917 = vmatprep.subr.bf16.mxu0 0
        %2918 = vmatpush1.bf16.msra.mxu0 %v2114
        %2919 = vmatprep.subr.bf16.mxu0 0
        %2920 = vmatpush1.bf16.msra.mxu0 %v2115
        %2921 = vmatprep.subr.bf16.mxu0 0
        %2922 = vmatpush1.bf16.msra.mxu0 %v2116
        %2923 = vmatprep.subr.bf16.mxu0 0
        %2924 = vmatpush1.bf16.msra.mxu0 %v2117
        %2925 = vmatprep.subr.bf16.mxu0 0
        %2926 = vmatpush1.bf16.msra.mxu0 %v2118
        %2927 = vmatprep.subr.bf16.mxu0 0
        %2928 = vmatpush1.bf16.msra.mxu0 %v2119
        %2929 = vmatprep.subr.bf16.mxu0 0
        %2930 = vmatpush1.bf16.msra.mxu0 %v2120
        %2931 = vmatprep.subr.bf16.mxu0 0
        %2932 = vmatpush1.bf16.msra.mxu0 %v2121
        %2933 = vmatprep.subr.bf16.mxu0 0
        %2934 = vmatpush1.bf16.msra.mxu0 %v2122
        %2935 = vmatprep.subr.bf16.mxu0 0
        %2936 = vmatpush1.bf16.msra.mxu0 %v2123
        %2937 = vmatprep.subr.bf16.mxu0 0
        %2938 = vmatpush1.bf16.msra.mxu0 %v2124
        %2939 = vmatprep.subr.bf16.mxu0 0
        %2940 = vmatpush1.bf16.msra.mxu0 %v2125
        %2941 = vmatprep.subr.bf16.mxu0 0
        %2942 = vmatpush1.bf16.msra.mxu0 %v2126
        %2943 = vmatprep.mubr.bf16.mxu0 %v856
        %2944 = vmatmul.mubr.bf16.gmra.mrb[0].mxu0 %v855
        %v2945 = vpop.f32.mrb[0].mxu0
        %v2946 = vadd.f32 %v2906, %v2945
        %v2947 = vpop.f32.mrb[0].mxu0
        %v2948 = vpop.f32.mrb[0].mxu0
        %v2949 = vpop.f32.mrb[0].mxu0
        %2950 = vdwg.mxu0
        %2951 = vmatprep.subr.bf16.mxu0 0
        %2952 = vmatpush1.bf16.msra.mxu0 %v2127
        %2953 = vmatprep.subr.bf16.mxu0 0
        %2954 = vmatpush1.bf16.msra.mxu0 %v2128
        %2955 = vmatprep.subr.bf16.mxu0 0
        %2956 = vmatpush1.bf16.msra.mxu0 %v2129
        %2957 = vmatprep.subr.bf16.mxu0 0
        %2958 = vmatpush1.bf16.msra.mxu0 %v2130
        %2959 = vmatprep.subr.bf16.mxu0 0
        %2960 = vmatpush1.bf16.msra.mxu0 %v2131
        %2961 = vmatprep.subr.bf16.mxu0 0
        %2962 = vmatpush1.bf16.msra.mxu0 %v2132
        %2963 = vmatprep.subr.bf16.mxu0 0
        %2964 = vmatpush1.bf16.msra.mxu0 %v2133
        %2965 = vmatprep.subr.bf16.mxu0 0
        %2966 = vmatpush1.bf16.msra.mxu0 %v2134
        %2967 = vmatprep.subr.bf16.mxu0 0
        %2968 = vmatpush1.bf16.msra.mxu0 %v2135
        %2969 = vmatprep.subr.bf16.mxu0 0
        %2970 = vmatpush1.bf16.msra.mxu0 %v2136
        %2971 = vmatprep.subr.bf16.mxu0 0
        %2972 = vmatpush1.bf16.msra.mxu0 %v2137
        %2973 = vmatprep.subr.bf16.mxu0 0
        %2974 = vmatpush1.bf16.msra.mxu0 %v2138
        %2975 = vmatprep.subr.bf16.mxu0 0
        %2976 = vmatpush1.bf16.msra.mxu0 %v2139
        %2977 = vmatprep.subr.bf16.mxu0 0
        %2978 = vmatpush1.bf16.msra.mxu0 %v2140
        %2979 = vmatprep.subr.bf16.mxu0 0
        %2980 = vmatpush1.bf16.msra.mxu0 %v2141
        %2981 = vmatprep.subr.bf16.mxu0 0
        %2982 = vmatpush1.bf16.msra.mxu0 %v2142
        %2983 = vmatprep.mubr.bf16.mxu0 %v858
        %2984 = vmatmul.mubr.bf16.gmra.mrb[0].mxu0 %v857
        %v2985 = vpop.f32.mrb[0].mxu0
        %v2986 = vadd.f32 %v2946, %v2985
        %v2987 = vpop.f32.mrb[0].mxu0
        %v2988 = vpop.f32.mrb[0].mxu0
        %v2989 = vpop.f32.mrb[0].mxu0
        %2990 = vdwg.mxu0
        %2991 = vmatprep.subr.bf16.mxu0 0
        %2992 = vmatpush1.bf16.msra.mxu0 %v2143
        %2993 = vmatprep.subr.bf16.mxu0 0
        %2994 = vmatpush1.bf16.msra.mxu0 %v2144
        %2995 = vmatprep.subr.bf16.mxu0 0
        %2996 = vmatpush1.bf16.msra.mxu0 %v2145
        %2997 = vmatprep.subr.bf16.mxu0 0
        %2998 = vmatpush1.bf16.msra.mxu0 %v2146
        %2999 = vmatprep.subr.bf16.mxu0 0
        %3000 = vmatpush1.bf16.msra.mxu0 %v2147
        %3001 = vmatprep.subr.bf16.mxu0 0
        %3002 = vmatpush1.bf16.msra.mxu0 %v2148
        %3003 = vmatprep.subr.bf16.mxu0 0
        %3004 = vmatpush1.bf16.msra.mxu0 %v2149
        %3005 = vmatprep.subr.bf16.mxu0 0
        %3006 = vmatpush1.bf16.msra.mxu0 %v2150
        %3007 = vmatprep.subr.bf16.mxu0 0
        %3008 = vmatpush1.bf16.msra.mxu0 %v2151
        %3009 = vmatprep.subr.bf16.mxu0 0
        %3010 = vmatpush1.bf16.msra.mxu0 %v2152
        %3011 = vmatprep.subr.bf16.mxu0 0
        %3012 = vmatpush1.bf16.msra.mxu0 %v2153
        %3013 = vmatprep.subr.bf16.mxu0 0
        %3014 = vmatpush1.bf16.msra.mxu0 %v2154
        %3015 = vmatprep.subr.bf16.mxu0 0
        %3016 = vmatpush1.bf16.msra.mxu0 %v2155
        %3017 = vmatprep.subr.bf16.mxu0 0
        %3018 = vmatpush1.bf16.msra.mxu0 %v2156
        %3019 = vmatprep.subr.bf16.mxu0 0
        %3020 = vmatpush1.bf16.msra.mxu0 %v2157
        %3021 = vmatprep.subr.bf16.mxu0 0
        %3022 = vmatpush1.bf16.msra.mxu0 %v2158
        %3023 = vmatprep.mubr.bf16.mxu0 %v860
        %3024 = vmatmul.mubr.bf16.gmra.mrb[0].mxu0 %v859
        %v3025 = vpop.f32.mrb[0].mxu0
        %v3026 = vadd.f32 %v2986, %v3025
        %v3027 = vpop.f32.mrb[0].mxu0
        %v3028 = vpop.f32.mrb[0].mxu0
        %v3029 = vpop.f32.mrb[0].mxu0
        %3030 = vdwg.mxu0
        %3031 = vmatprep.subr.bf16.mxu0 0
        %3032 = vmatpush1.bf16.msra.mxu0 %v2159
        %3033 = vmatprep.subr.bf16.mxu0 0
        %3034 = vmatpush1.bf16.msra.mxu0 %v2160
        %3035 = vmatprep.subr.bf16.mxu0 0
        %3036 = vmatpush1.bf16.msra.mxu0 %v2161
        %3037 = vmatprep.subr.bf16.mxu0 0
        %3038 = vmatpush1.bf16.msra.mxu0 %v2162
        %3039 = vmatprep.subr.bf16.mxu0 0
        %3040 = vmatpush1.bf16.msra.mxu0 %v2163
        %3041 = vmatprep.subr.bf16.mxu0 0
        %3042 = vmatpush1.bf16.msra.mxu0 %v2164
        %3043 = vmatprep.subr.bf16.mxu0 0
        %3044 = vmatpush1.bf16.msra.mxu0 %v2165
        %3045 = vmatprep.subr.bf16.mxu0 0
        %3046 = vmatpush1.bf16.msra.mxu0 %v2166
        %3047 = vmatprep.subr.bf16.mxu0 0
        %3048 = vmatpush1.bf16.msra.mxu0 %v2167
        %3049 = vmatprep.subr.bf16.mxu0 0
        %3050 = vmatpush1.bf16.msra.mxu0 %v2168
        %3051 = vmatprep.subr.bf16.mxu0 0
        %3052 = vmatpush1.bf16.msra.mxu0 %v2169
        %3053 = vmatprep.subr.bf16.mxu0 0
        %3054 = vmatpush1.bf16.msra.mxu0 %v2170
        %3055 = vmatprep.subr.bf16.mxu0 0
        %3056 = vmatpush1.bf16.msra.mxu0 %v2171
        %3057 = vmatprep.subr.bf16.mxu0 0
        %3058 = vmatpush1.bf16.msra.mxu0 %v2172
        %3059 = vmatprep.subr.bf16.mxu0 0
        %3060 = vmatpush1.bf16.msra.mxu0 %v2173
        %3061 = vmatprep.subr.bf16.mxu0 0
        %3062 = vmatpush1.bf16.msra.mxu0 %v2174
        %3063 = vmatprep.mubr.bf16.mxu0 %v862
        %3064 = vmatmul.mubr.bf16.gmra.mrb[0].mxu0 %v861
        %v3065 = vpop.f32.mrb[0].mxu0
        %v3066 = vadd.f32 %v3026, %v3065
        %v3067 = vpop.f32.mrb[0].mxu0
        %v3068 = vpop.f32.mrb[0].mxu0
        %v3069 = vpop.f32.mrb[0].mxu0
        %3070 = vdwg.mxu0
        %v3071 = vpack.c.bf16 %v3066, %v3066
        %v3072 = vld [vmem:[%s213] sm:$0xff]
        %v3073 = vld [vmem:[%s213 + $0x8] sm:$0xff]
        %v3074 = vld [vmem:[%s213 + $0x10] sm:$0xff]
        %v3075 = vld [vmem:[%s213 + $0x18] sm:$0xff]
        %v3076 = vld [vmem:[%s213 + $0x20] sm:$0xff]
        %v3077 = vld [vmem:[%s213 + $0x28] sm:$0xff]
        %v3078 = vld [vmem:[%s213 + $0x30] sm:$0xff]
        %v3079 = vld [vmem:[%s213 + $0x38] sm:$0xff]
        %v3080 = vld [vmem:[%s213 + $0x40] sm:$0xff]
        %v3081 = vld [vmem:[%s213 + $0x48] sm:$0xff]
        %v3082 = vld [vmem:[%s213 + $0x50] sm:$0xff]
        %v3083 = vld [vmem:[%s213 + $0x58] sm:$0xff]
        %v3084 = vld [vmem:[%s213 + $0x60] sm:$0xff]
        %v3085 = vld [vmem:[%s213 + $0x68] sm:$0xff]
        %v3086 = vld [vmem:[%s213 + $0x70] sm:$0xff]
        %v3087 = vld [vmem:[%s213 + $0x78] sm:$0xff]
        %v3088 = vld [vmem:[%s213 + $0x80] sm:$0xff]
        %v3089 = vld [vmem:[%s213 + $0x88] sm:$0xff]
        %v3090 = vld [vmem:[%s213 + $0x90] sm:$0xff]
        %v3091 = vld [vmem:[%s213 + $0x98] sm:$0xff]
        %v3092 = vld [vmem:[%s213 + $0xa0] sm:$0xff]
        %v3093 = vld [vmem:[%s213 + $0xa8] sm:$0xff]
        %v3094 = vld [vmem:[%s213 + $0xb0] sm:$0xff]
        %v3095 = vld [vmem:[%s213 + $0xb8] sm:$0xff]
        %v3096 = vld [vmem:[%s213 + $0xc0] sm:$0xff]
        %v3097 = vld [vmem:[%s213 + $0xc8] sm:$0xff]
        %v3098 = vld [vmem:[%s213 + $0xd0] sm:$0xff]
        %v3099 = vld [vmem:[%s213 + $0xd8] sm:$0xff]
        %v3100 = vld [vmem:[%s213 + $0xe0] sm:$0xff]
        %v3101 = vld [vmem:[%s213 + $0xe8] sm:$0xff]
        %v3102 = vld [vmem:[%s213 + $0xf0] sm:$0xff]
        %v3103 = vld [vmem:[%s213 + $0xf8] sm:$0xff]
        %v3104 = vld [vmem:[%s213 + $0x100] sm:$0xff]
        %v3105 = vld [vmem:[%s213 + $0x108] sm:$0xff]
        %v3106 = vld [vmem:[%s213 + $0x110] sm:$0xff]
        %v3107 = vld [vmem:[%s213 + $0x118] sm:$0xff]
        %v3108 = vld [vmem:[%s213 + $0x120] sm:$0xff]
        %v3109 = vld [vmem:[%s213 + $0x128] sm:$0xff]
        %v3110 = vld [vmem:[%s213 + $0x130] sm:$0xff]
        %v3111 = vld [vmem:[%s213 + $0x138] sm:$0xff]
        %v3112 = vld [vmem:[%s213 + $0x140] sm:$0xff]
        %v3113 = vld [vmem:[%s213 + $0x148] sm:$0xff]
        %v3114 = vld [vmem:[%s213 + $0x150] sm:$0xff]
        %v3115 = vld [vmem:[%s213 + $0x158] sm:$0xff]
        %v3116 = vld [vmem:[%s213 + $0x160] sm:$0xff]
        %v3117 = vld [vmem:[%s213 + $0x168] sm:$0xff]
        %v3118 = vld [vmem:[%s213 + $0x170] sm:$0xff]
        %v3119 = vld [vmem:[%s213 + $0x178] sm:$0xff]
        %v3120 = vld [vmem:[%s213 + $0x180] sm:$0xff]
        %v3121 = vld [vmem:[%s213 + $0x188] sm:$0xff]
        %v3122 = vld [vmem:[%s213 + $0x190] sm:$0xff]
        %v3123 = vld [vmem:[%s213 + $0x198] sm:$0xff]
        %v3124 = vld [vmem:[%s213 + $0x1a0] sm:$0xff]
        %v3125 = vld [vmem:[%s213 + $0x1a8] sm:$0xff]
        %v3126 = vld [vmem:[%s213 + $0x1b0] sm:$0xff]
        %v3127 = vld [vmem:[%s213 + $0x1b8] sm:$0xff]
        %v3128 = vld [vmem:[%s213 + $0x1c0] sm:$0xff]
        %v3129 = vld [vmem:[%s213 + $0x1c8] sm:$0xff]
        %v3130 = vld [vmem:[%s213 + $0x1d0] sm:$0xff]
        %v3131 = vld [vmem:[%s213 + $0x1d8] sm:$0xff]
        %v3132 = vld [vmem:[%s213 + $0x1e0] sm:$0xff]
        %v3133 = vld [vmem:[%s213 + $0x1e8] sm:$0xff]
        %v3134 = vld [vmem:[%s213 + $0x1f0] sm:$0xff]
        %v3135 = vld [vmem:[%s213 + $0x1f8] sm:$0xff]
        %v3136 = vld [vmem:[%s246] sm:$0xff]
        %v3138 = vlaneseq
        %v3139 = vshrl.u32 %v3138, 7
        %v3140 = vsub.s32 0, %v3139
        %v3141 = vrot.slane %v3136, %v3140
        %v3142 = vlaneseq
        %v3143 = vshrl.u32 %v3142, 7
        %v3144 = vsub.s32 1, %v3143
        %v3145 = vrot.slane %v3136, %v3144
        %v3146 = vlaneseq
        %v3147 = vshrl.u32 %v3146, 7
        %v3148 = vsub.s32 2, %v3147
        %v3149 = vrot.slane %v3136, %v3148
        %v3150 = vlaneseq
        %v3151 = vshrl.u32 %v3150, 7
        %v3152 = vsub.s32 3, %v3151
        %v3153 = vrot.slane %v3136, %v3152
        %v3154 = vlaneseq
        %v3155 = vshrl.u32 %v3154, 7
        %v3156 = vsub.s32 4, %v3155
        %v3157 = vrot.slane %v3136, %v3156
        %v3158 = vlaneseq
        %v3159 = vshrl.u32 %v3158, 7
        %v3160 = vsub.s32 5, %v3159
        %v3161 = vrot.slane %v3136, %v3160
        %v3162 = vlaneseq
        %v3163 = vshrl.u32 %v3162, 7
        %v3164 = vsub.s32 6, %v3163
        %v3165 = vrot.slane %v3136, %v3164
        %v3166 = vlaneseq
        %v3167 = vshrl.u32 %v3166, 7
        %v3168 = vsub.s32 7, %v3167
        %v3169 = vrot.slane %v3136, %v3168
        %v3242 = vunpack.c.l.b16 %v3072
        %v3243 = vunpack.c.h.b16 %v3072
        %v3244 = vunpack.c.l.b16 %v3073
        %v3245 = vunpack.c.h.b16 %v3073
        %v3246 = vunpack.c.l.b16 %v3074
        %v3247 = vunpack.c.h.b16 %v3074
        %v3248 = vunpack.c.l.b16 %v3075
        %v3249 = vunpack.c.h.b16 %v3075
        %v3250 = vunpack.c.l.b16 %v3076
        %v3251 = vunpack.c.h.b16 %v3076
        %v3252 = vunpack.c.l.b16 %v3077
        %v3253 = vunpack.c.h.b16 %v3077
        %v3254 = vunpack.c.l.b16 %v3078
        %v3255 = vunpack.c.h.b16 %v3078
        %v3256 = vunpack.c.l.b16 %v3079
        %v3257 = vunpack.c.h.b16 %v3079
        %v3258 = vunpack.c.l.b16 %v3080
        %v3259 = vunpack.c.h.b16 %v3080
        %v3260 = vunpack.c.l.b16 %v3081
        %v3261 = vunpack.c.h.b16 %v3081
        %v3262 = vunpack.c.l.b16 %v3082
        %v3263 = vunpack.c.h.b16 %v3082
        %v3264 = vunpack.c.l.b16 %v3083
        %v3265 = vunpack.c.h.b16 %v3083
        %v3266 = vunpack.c.l.b16 %v3084
        %v3267 = vunpack.c.h.b16 %v3084
        %v3268 = vunpack.c.l.b16 %v3085
        %v3269 = vunpack.c.h.b16 %v3085
        %v3270 = vunpack.c.l.b16 %v3086
        %v3271 = vunpack.c.h.b16 %v3086
        %v3272 = vunpack.c.l.b16 %v3087
        %v3273 = vunpack.c.h.b16 %v3087
        %v3274 = vunpack.c.l.b16 %v3088
        %v3275 = vunpack.c.h.b16 %v3088
        %v3276 = vunpack.c.l.b16 %v3089
        %v3277 = vunpack.c.h.b16 %v3089
        %v3278 = vunpack.c.l.b16 %v3090
        %v3279 = vunpack.c.h.b16 %v3090
        %v3280 = vunpack.c.l.b16 %v3091
        %v3281 = vunpack.c.h.b16 %v3091
        %v3282 = vunpack.c.l.b16 %v3092
        %v3283 = vunpack.c.h.b16 %v3092
        %v3284 = vunpack.c.l.b16 %v3093
        %v3285 = vunpack.c.h.b16 %v3093
        %v3286 = vunpack.c.l.b16 %v3094
        %v3287 = vunpack.c.h.b16 %v3094
        %v3288 = vunpack.c.l.b16 %v3095
        %v3289 = vunpack.c.h.b16 %v3095
        %v3290 = vunpack.c.l.b16 %v3096
        %v3291 = vunpack.c.h.b16 %v3096
        %v3292 = vunpack.c.l.b16 %v3097
        %v3293 = vunpack.c.h.b16 %v3097
        %v3294 = vunpack.c.l.b16 %v3098
        %v3295 = vunpack.c.h.b16 %v3098
        %v3296 = vunpack.c.l.b16 %v3099
        %v3297 = vunpack.c.h.b16 %v3099
        %v3298 = vunpack.c.l.b16 %v3100
        %v3299 = vunpack.c.h.b16 %v3100
        %v3300 = vunpack.c.l.b16 %v3101
        %v3301 = vunpack.c.h.b16 %v3101
        %v3302 = vunpack.c.l.b16 %v3102
        %v3303 = vunpack.c.h.b16 %v3102
        %v3304 = vunpack.c.l.b16 %v3103
        %v3305 = vunpack.c.h.b16 %v3103
        %v3306 = vunpack.c.l.b16 %v3104
        %v3307 = vunpack.c.h.b16 %v3104
        %v3308 = vunpack.c.l.b16 %v3105
        %v3309 = vunpack.c.h.b16 %v3105
        %v3310 = vunpack.c.l.b16 %v3106
        %v3311 = vunpack.c.h.b16 %v3106
        %v3312 = vunpack.c.l.b16 %v3107
        %v3313 = vunpack.c.h.b16 %v3107
        %v3314 = vunpack.c.l.b16 %v3108
        %v3315 = vunpack.c.h.b16 %v3108
        %v3316 = vunpack.c.l.b16 %v3109
        %v3317 = vunpack.c.h.b16 %v3109
        %v3318 = vunpack.c.l.b16 %v3110
        %v3319 = vunpack.c.h.b16 %v3110
        %v3320 = vunpack.c.l.b16 %v3111
        %v3321 = vunpack.c.h.b16 %v3111
        %v3322 = vunpack.c.l.b16 %v3112
        %v3323 = vunpack.c.h.b16 %v3112
        %v3324 = vunpack.c.l.b16 %v3113
        %v3325 = vunpack.c.h.b16 %v3113
        %v3326 = vunpack.c.l.b16 %v3114
        %v3327 = vunpack.c.h.b16 %v3114
        %v3328 = vunpack.c.l.b16 %v3115
        %v3329 = vunpack.c.h.b16 %v3115
        %v3330 = vunpack.c.l.b16 %v3116
        %v3331 = vunpack.c.h.b16 %v3116
        %v3332 = vunpack.c.l.b16 %v3117
        %v3333 = vunpack.c.h.b16 %v3117
        %v3334 = vunpack.c.l.b16 %v3118
        %v3335 = vunpack.c.h.b16 %v3118
        %v3336 = vunpack.c.l.b16 %v3119
        %v3337 = vunpack.c.h.b16 %v3119
        %v3338 = vunpack.c.l.b16 %v3120
        %v3339 = vunpack.c.h.b16 %v3120
        %v3340 = vunpack.c.l.b16 %v3121
        %v3341 = vunpack.c.h.b16 %v3121
        %v3342 = vunpack.c.l.b16 %v3122
        %v3343 = vunpack.c.h.b16 %v3122
        %v3344 = vunpack.c.l.b16 %v3123
        %v3345 = vunpack.c.h.b16 %v3123
        %v3346 = vunpack.c.l.b16 %v3124
        %v3347 = vunpack.c.h.b16 %v3124
        %v3348 = vunpack.c.l.b16 %v3125
        %v3349 = vunpack.c.h.b16 %v3125
        %v3350 = vunpack.c.l.b16 %v3126
        %v3351 = vunpack.c.h.b16 %v3126
        %v3352 = vunpack.c.l.b16 %v3127
        %v3353 = vunpack.c.h.b16 %v3127
        %v3354 = vunpack.c.l.b16 %v3128
        %v3355 = vunpack.c.h.b16 %v3128
        %v3356 = vunpack.c.l.b16 %v3129
        %v3357 = vunpack.c.h.b16 %v3129
        %v3358 = vunpack.c.l.b16 %v3130
        %v3359 = vunpack.c.h.b16 %v3130
        %v3360 = vunpack.c.l.b16 %v3131
        %v3361 = vunpack.c.h.b16 %v3131
        %v3362 = vunpack.c.l.b16 %v3132
        %v3363 = vunpack.c.h.b16 %v3132
        %v3364 = vunpack.c.l.b16 %v3133
        %v3365 = vunpack.c.h.b16 %v3133
        %v3366 = vunpack.c.l.b16 %v3134
        %v3367 = vunpack.c.h.b16 %v3134
        %v3368 = vunpack.c.l.b16 %v3135
        %v3369 = vunpack.c.h.b16 %v3135
        %v3370 = vpack.c.b16 %v3250, %v3242
        %v3371 = vpack.c.b16 %v3251, %v3243
        %v3372 = vpack.c.b16 %v3252, %v3244
        %v3373 = vpack.c.b16 %v3253, %v3245
        %v3374 = vpack.c.b16 %v3254, %v3246
        %v3375 = vpack.c.b16 %v3255, %v3247
        %v3376 = vpack.c.b16 %v3256, %v3248
        %v3377 = vpack.c.b16 %v3257, %v3249
        %v3378 = vpack.c.b16 %v3266, %v3258
        %v3379 = vpack.c.b16 %v3267, %v3259
        %v3380 = vpack.c.b16 %v3268, %v3260
        %v3381 = vpack.c.b16 %v3269, %v3261
        %v3382 = vpack.c.b16 %v3270, %v3262
        %v3383 = vpack.c.b16 %v3271, %v3263
        %v3384 = vpack.c.b16 %v3272, %v3264
        %v3385 = vpack.c.b16 %v3273, %v3265
        %v3386 = vpack.c.b16 %v3282, %v3274
        %v3387 = vpack.c.b16 %v3283, %v3275
        %v3388 = vpack.c.b16 %v3284, %v3276
        %v3389 = vpack.c.b16 %v3285, %v3277
        %v3390 = vpack.c.b16 %v3286, %v3278
        %v3391 = vpack.c.b16 %v3287, %v3279
        %v3392 = vpack.c.b16 %v3288, %v3280
        %v3393 = vpack.c.b16 %v3289, %v3281
        %v3394 = vpack.c.b16 %v3298, %v3290
        %v3395 = vpack.c.b16 %v3299, %v3291
        %v3396 = vpack.c.b16 %v3300, %v3292
        %v3397 = vpack.c.b16 %v3301, %v3293
        %v3398 = vpack.c.b16 %v3302, %v3294
        %v3399 = vpack.c.b16 %v3303, %v3295
        %v3400 = vpack.c.b16 %v3304, %v3296
        %v3401 = vpack.c.b16 %v3305, %v3297
        %v3402 = vpack.c.b16 %v3314, %v3306
        %v3403 = vpack.c.b16 %v3315, %v3307
        %v3404 = vpack.c.b16 %v3316, %v3308
        %v3405 = vpack.c.b16 %v3317, %v3309
        %v3406 = vpack.c.b16 %v3318, %v3310
        %v3407 = vpack.c.b16 %v3319, %v3311
        %v3408 = vpack.c.b16 %v3320, %v3312
        %v3409 = vpack.c.b16 %v3321, %v3313
        %v3410 = vpack.c.b16 %v3330, %v3322
        %v3411 = vpack.c.b16 %v3331, %v3323
        %v3412 = vpack.c.b16 %v3332, %v3324
        %v3413 = vpack.c.b16 %v3333, %v3325
        %v3414 = vpack.c.b16 %v3334, %v3326
        %v3415 = vpack.c.b16 %v3335, %v3327
        %v3416 = vpack.c.b16 %v3336, %v3328
        %v3417 = vpack.c.b16 %v3337, %v3329
        %v3418 = vpack.c.b16 %v3346, %v3338
        %v3419 = vpack.c.b16 %v3347, %v3339
        %v3420 = vpack.c.b16 %v3348, %v3340
        %v3421 = vpack.c.b16 %v3349, %v3341
        %v3422 = vpack.c.b16 %v3350, %v3342
        %v3423 = vpack.c.b16 %v3351, %v3343
        %v3424 = vpack.c.b16 %v3352, %v3344
        %v3425 = vpack.c.b16 %v3353, %v3345
        %v3426 = vpack.c.b16 %v3362, %v3354
        %v3427 = vpack.c.b16 %v3363, %v3355
        %v3428 = vpack.c.b16 %v3364, %v3356
        %v3429 = vpack.c.b16 %v3365, %v3357
        %v3430 = vpack.c.b16 %v3366, %v3358
        %v3431 = vpack.c.b16 %v3367, %v3359
        %v3432 = vpack.c.b16 %v3368, %v3360
        %v3433 = vpack.c.b16 %v3369, %v3361
        %3498 = vmatprep.subr.bf16.mxu0 %v3371
        %3499 = vmatpush1.bf16.msra.mxu0 %v3370
        %3500 = vmatprep.subr.bf16.mxu0 %v3379
        %3501 = vmatpush1.bf16.msra.mxu0 %v3378
        %3502 = vmatprep.subr.bf16.mxu0 %v3387
        %3503 = vmatpush1.bf16.msra.mxu0 %v3386
        %3504 = vmatprep.subr.bf16.mxu0 %v3395
        %3505 = vmatpush1.bf16.msra.mxu0 %v3394
        %3506 = vmatprep.subr.bf16.mxu0 %v3403
        %3507 = vmatpush1.bf16.msra.mxu0 %v3402
        %3508 = vmatprep.subr.bf16.mxu0 %v3411
        %3509 = vmatpush1.bf16.msra.mxu0 %v3410
        %3510 = vmatprep.subr.bf16.mxu0 %v3419
        %3511 = vmatpush1.bf16.msra.mxu0 %v3418
        %3512 = vmatprep.subr.bf16.mxu0 %v3427
        %3513 = vmatpush1.bf16.msra.mxu0 %v3426
        %3514 = vmatprep.subr.bf16.mxu0 0
        %3515 = vmatpush1.bf16.msra.mxu0 0
        %3516 = vmatprep.subr.bf16.mxu0 0
        %3517 = vmatpush1.bf16.msra.mxu0 0
        %3518 = vmatprep.subr.bf16.mxu0 0
        %3519 = vmatpush1.bf16.msra.mxu0 0
        %3520 = vmatprep.subr.bf16.mxu0 0
        %3521 = vmatpush1.bf16.msra.mxu0 0
        %3522 = vmatprep.subr.bf16.mxu0 0
        %3523 = vmatpush1.bf16.msra.mxu0 0
        %3524 = vmatprep.subr.bf16.mxu0 0
        %3525 = vmatpush1.bf16.msra.mxu0 0
        %3526 = vmatprep.subr.bf16.mxu0 0
        %3527 = vmatpush1.bf16.msra.mxu0 0
        %3528 = vmatprep.subr.bf16.mxu0 0
        %3529 = vmatpush1.bf16.msra.mxu0 0
        %3530 = vmatprep.mubr.bf16.mxu0 0
        %3531 = vmatmul.mubr.bf16.gmra.mrb[0].mxu0 %v3071
        %v3532 = vpop.f32.mrb[0].mxu0
        %v3533 = vadd.f32 %v3141, %v3532
        %v3534 = vpop.f32.mrb[0].mxu0
        %v3535 = vadd.f32 %v3145, %v3534
        %v3536 = vpop.f32.mrb[0].mxu0
        %v3537 = vpop.f32.mrb[0].mxu0
        %3538 = vdwg.mxu0
        %3539 = vmatprep.subr.bf16.mxu0 %v3373
        %3540 = vmatpush1.bf16.msra.mxu0 %v3372
        %3541 = vmatprep.subr.bf16.mxu0 %v3381
        %3542 = vmatpush1.bf16.msra.mxu0 %v3380
        %3543 = vmatprep.subr.bf16.mxu0 %v3389
        %3544 = vmatpush1.bf16.msra.mxu0 %v3388
        %3545 = vmatprep.subr.bf16.mxu0 %v3397
        %3546 = vmatpush1.bf16.msra.mxu0 %v3396
        %3547 = vmatprep.subr.bf16.mxu0 %v3405
        %3548 = vmatpush1.bf16.msra.mxu0 %v3404
        %3549 = vmatprep.subr.bf16.mxu0 %v3413
        %3550 = vmatpush1.bf16.msra.mxu0 %v3412
        %3551 = vmatprep.subr.bf16.mxu0 %v3421
        %3552 = vmatpush1.bf16.msra.mxu0 %v3420
        %3553 = vmatprep.subr.bf16.mxu0 %v3429
        %3554 = vmatpush1.bf16.msra.mxu0 %v3428
        %3555 = vmatprep.subr.bf16.mxu0 0
        %3556 = vmatpush1.bf16.msra.mxu0 0
        %3557 = vmatprep.subr.bf16.mxu0 0
        %3558 = vmatpush1.bf16.msra.mxu0 0
        %3559 = vmatprep.subr.bf16.mxu0 0
        %3560 = vmatpush1.bf16.msra.mxu0 0
        %3561 = vmatprep.subr.bf16.mxu0 0
        %3562 = vmatpush1.bf16.msra.mxu0 0
        %3563 = vmatprep.subr.bf16.mxu0 0
        %3564 = vmatpush1.bf16.msra.mxu0 0
        %3565 = vmatprep.subr.bf16.mxu0 0
        %3566 = vmatpush1.bf16.msra.mxu0 0
        %3567 = vmatprep.subr.bf16.mxu0 0
        %3568 = vmatpush1.bf16.msra.mxu0 0
        %3569 = vmatprep.subr.bf16.mxu0 0
        %3570 = vmatpush1.bf16.msra.mxu0 0
        %3571 = vmatprep.mubr.bf16.mxu0 0
        %3572 = vmatmul.mubr.bf16.gmra.mrb[0].mxu0 %v3071
        %v3573 = vpop.f32.mrb[0].mxu0
        %v3574 = vadd.f32 %v3149, %v3573
        %v3575 = vpop.f32.mrb[0].mxu0
        %v3576 = vadd.f32 %v3153, %v3575
        %v3577 = vpop.f32.mrb[0].mxu0
        %v3578 = vpop.f32.mrb[0].mxu0
        %3579 = vdwg.mxu0
        %3580 = vmatprep.subr.bf16.mxu0 %v3375
        %3581 = vmatpush1.bf16.msra.mxu0 %v3374
        %3582 = vmatprep.subr.bf16.mxu0 %v3383
        %3583 = vmatpush1.bf16.msra.mxu0 %v3382
        %3584 = vmatprep.subr.bf16.mxu0 %v3391
        %3585 = vmatpush1.bf16.msra.mxu0 %v3390
        %3586 = vmatprep.subr.bf16.mxu0 %v3399
        %3587 = vmatpush1.bf16.msra.mxu0 %v3398
        %3588 = vmatprep.subr.bf16.mxu0 %v3407
        %3589 = vmatpush1.bf16.msra.mxu0 %v3406
        %3590 = vmatprep.subr.bf16.mxu0 %v3415
        %3591 = vmatpush1.bf16.msra.mxu0 %v3414
        %3592 = vmatprep.subr.bf16.mxu0 %v3423
        %3593 = vmatpush1.bf16.msra.mxu0 %v3422
        %3594 = vmatprep.subr.bf16.mxu0 %v3431
        %3595 = vmatpush1.bf16.msra.mxu0 %v3430
        %3596 = vmatprep.subr.bf16.mxu0 0
        %3597 = vmatpush1.bf16.msra.mxu0 0
        %3598 = vmatprep.subr.bf16.mxu0 0
        %3599 = vmatpush1.bf16.msra.mxu0 0
        %3600 = vmatprep.subr.bf16.mxu0 0
        %3601 = vmatpush1.bf16.msra.mxu0 0
        %3602 = vmatprep.subr.bf16.mxu0 0
        %3603 = vmatpush1.bf16.msra.mxu0 0
        %3604 = vmatprep.subr.bf16.mxu0 0
        %3605 = vmatpush1.bf16.msra.mxu0 0
        %3606 = vmatprep.subr.bf16.mxu0 0
        %3607 = vmatpush1.bf16.msra.mxu0 0
        %3608 = vmatprep.subr.bf16.mxu0 0
        %3609 = vmatpush1.bf16.msra.mxu0 0
        %3610 = vmatprep.subr.bf16.mxu0 0
        %3611 = vmatpush1.bf16.msra.mxu0 0
        %3612 = vmatprep.mubr.bf16.mxu0 0
        %3613 = vmatmul.mubr.bf16.gmra.mrb[0].mxu0 %v3071
        %v3614 = vpop.f32.mrb[0].mxu0
        %v3615 = vadd.f32 %v3157, %v3614
        %v3616 = vpop.f32.mrb[0].mxu0
        %v3617 = vadd.f32 %v3161, %v3616
        %v3618 = vpop.f32.mrb[0].mxu0
        %v3619 = vpop.f32.mrb[0].mxu0
        %3620 = vdwg.mxu0
        %3621 = vmatprep.subr.bf16.mxu0 %v3377
        %3622 = vmatpush1.bf16.msra.mxu0 %v3376
        %3623 = vmatprep.subr.bf16.mxu0 %v3385
        %3624 = vmatpush1.bf16.msra.mxu0 %v3384
        %3625 = vmatprep.subr.bf16.mxu0 %v3393
        %3626 = vmatpush1.bf16.msra.mxu0 %v3392
        %3627 = vmatprep.subr.bf16.mxu0 %v3401
        %3628 = vmatpush1.bf16.msra.mxu0 %v3400
        %3629 = vmatprep.subr.bf16.mxu0 %v3409
        %3630 = vmatpush1.bf16.msra.mxu0 %v3408
        %3631 = vmatprep.subr.bf16.mxu0 %v3417
        %3632 = vmatpush1.bf16.msra.mxu0 %v3416
        %3633 = vmatprep.subr.bf16.mxu0 %v3425
        %3634 = vmatpush1.bf16.msra.mxu0 %v3424
        %3635 = vmatprep.subr.bf16.mxu0 %v3433
        %3636 = vmatpush1.bf16.msra.mxu0 %v3432
        %3637 = vmatprep.subr.bf16.mxu0 0
        %3638 = vmatpush1.bf16.msra.mxu0 0
        %3639 = vmatprep.subr.bf16.mxu0 0
        %3640 = vmatpush1.bf16.msra.mxu0 0
        %3641 = vmatprep.subr.bf16.mxu0 0
        %3642 = vmatpush1.bf16.msra.mxu0 0
        %3643 = vmatprep.subr.bf16.mxu0 0
        %3644 = vmatpush1.bf16.msra.mxu0 0
        %3645 = vmatprep.subr.bf16.mxu0 0
        %3646 = vmatpush1.bf16.msra.mxu0 0
        %3647 = vmatprep.subr.bf16.mxu0 0
        %3648 = vmatpush1.bf16.msra.mxu0 0
        %3649 = vmatprep.subr.bf16.mxu0 0
        %3650 = vmatpush1.bf16.msra.mxu0 0
        %3651 = vmatprep.subr.bf16.mxu0 0
        %3652 = vmatpush1.bf16.msra.mxu0 0
        %3653 = vmatprep.mubr.bf16.mxu0 0
        %3654 = vmatmul.mubr.bf16.gmra.mrb[0].mxu0 %v3071
        %v3655 = vpop.f32.mrb[0].mxu0
        %v3656 = vadd.f32 %v3165, %v3655
        %v3657 = vpop.f32.mrb[0].mxu0
        %v3658 = vadd.f32 %v3169, %v3657
        %v3659 = vpop.f32.mrb[0].mxu0
        %v3660 = vpop.f32.mrb[0].mxu0
        %3661 = vdwg.mxu0
        %3662 = vst [vmem:[%s252] sm:$0xff] %v3533
        %3663 = vst [vmem:[%s252 + $0x8] sm:$0xff] %v3535
        %3664 = vst [vmem:[%s252 + $0x10] sm:$0xff] %v3574
        %3665 = vst [vmem:[%s252 + $0x18] sm:$0xff] %v3576
        %3666 = vst [vmem:[%s252 + $0x20] sm:$0xff] %v3615
        %3667 = vst [vmem:[%s252 + $0x28] sm:$0xff] %v3617
        %3668 = vst [vmem:[%s252 + $0x30] sm:$0xff] %v3656
        %3669 = vst [vmem:[%s252 + $0x38] sm:$0xff] %v3658
        %s3670 = smul.u32 8, %s19
        %p3671 = scmp.lt.s32.totalorder %s3670, 31
        %s3672 = scalar_select %p3671, %s3670, 31
        %s3673 = smul.addr %s3672, 8
        %s3674 = scalar_lea.vmem %s4, %s3673
        // Predicated region
        $region45: #{autoencoder1_forward.1} parent=35 // pred_check
          %p3675 = pneg %p131
        $region46: #{autoencoder1_forward.1} parent=35 // pred_check_branch
          %3677 = sbr.rel (%p3675) target = $region48
        $region47: #{autoencoder1_forward.1} parent=35 // pred_region
          %s3678 = smul.u32 8, %s19
        $region48: #{autoencoder1_forward.1} parent=35 // pred_fallthru
          _
      $region36: #{autoencoder1_forward.1} parent=5 // pred_fallthru
        _
      %p3679 = scmp.le.s32.totalorder 2, %s14
      // Predicated region
      $region49: #{autoencoder1_forward.1} parent=5 // pred_check
        %p3680 = pneg %p3679
      $region50: #{autoencoder1_forward.1} parent=5 // pred_check_branch
        %3682 = sbr.rel (%p3680) target = $region52
      $region51: #{autoencoder1_forward.1} parent=5 // pred_region
        %s3683 = ssub.s32 %s14, 2
        // Predicated region
        $region53: #{autoencoder1_forward.1} parent=51 // pred_check
          %p3684 = pneg %p137
        $region54: #{autoencoder1_forward.1} parent=51 // pred_check_branch
          %3686 = sbr.rel (%p3684) target = $region56
        $region55: #{autoencoder1_forward.1} parent=51 // pred_region
          %s3687 = smul.u32 8, %s20
          %p3688 = scmp.lt.s32.totalorder %s3687, 31
          %s3689 = scalar_select %p3688, %s3687, 31
          %s3690 = smul.addr %s3689, 8
          %s3691 = scalar_lea.vmem %s4, %s3690
        $region56: #{autoencoder1_forward.1} parent=51 // pred_fallthru
          _
      $region52: #{autoencoder1_forward.1} parent=5 // pred_fallthru
        _
    $region6: #{autoencoder1_forward.1} parent=1 // loop_footer
      %s18 = sadd.s32 1, %s14
    $region7: #{autoencoder1_forward.1} parent=1 // loop_footer_branch
      %13 = sbr.rel target = $region3
    $region8: #{autoencoder1_forward.1} parent=1 // loop_exit
      _
    %3692 = vsyncpa [#allocation3], 1
    %s3693 = scalar_lea.sflag [#allocation3], 1
    %3694 = vsyncpa %s3693, 1
    %3695 = vsyncpa [#allocation5], 1
    %s3696 = scalar_lea.sflag [#allocation5], 1
    %3697 = vsyncpa %s3696, 1

</llo_original>
